<compile_context>
chip_gen: v6e
topology: v6e:2x2x1
jax: 0.10.0
libtpu: 0.0.40
codegen_flags: <defaults>
</compile_context>

<pallas_src>
import functools

import jax
import jax.numpy as jnp
from jax.experimental import pallas as pl
from jax.experimental.pallas import tpu as pltpu


def _round_up(v, m):
    return ((v + m - 1) // m) * m


# ------------------------------- fused kernel -------------------------------

def _tcn_fused_kernel(*refs, layer_cfgs, kernel_size, halo_pad, pad_rows,
                      use_halo):
    """Whole _TemporalConvNet forward for one (batch, time-tile) grid step.

    refs (in order):
      [halo_ref]                (halo_pad, C_in0p)    only when use_halo
      x_ref                     (tile_t,  C_in0p)     bf16
      per layer: w1 (k*Ci, Co) bf16, b1 (1, Co) f32, w2 (k*Co, Co) bf16,
                 b2 (1, Co) f32, [wd (Ci, Co) bf16, bd (1, Co) f32]
      out_ref                   (tile_t, C_lastp)
      hist                      (pad_rows + rows, C_max) bf16 VMEM scratch
    """
    k = kernel_size
    idx = 0
    if use_halo:
        halo_ref = refs[idx]; idx += 1
    x_ref = refs[idx]; idx += 1
    layer_refs = []
    for _, has_ds in layer_cfgs:
        n = 6 if has_ds else 4
        layer_refs.append(refs[idx:idx + n])
        idx += n
    out_ref = refs[idx]; idx += 1
    hist = refs[idx]                                    # VMEM scratch

    # Zero the causal-padding rows of the history scratch (scratch contents
    # are undefined on each core's first grid step; this is pad_rows x C only).
    hist[0:pad_rows, :] = jnp.zeros((pad_rows, hist.shape[1]), hist.dtype)

    if use_halo:
        # halo rows are genuine history (zeros for the first tile, supplied by
        # the wrapper), so no masking / (ti > 0) multiply is needed here.
        h = jnp.concatenate([halo_ref[...], x_ref[...]], axis=0)
    else:
        h = x_ref[...]
    rows = h.shape[0]

    def causal_conv(hin, w_ref, b_ref, dilation):
        # One fused matmul per conv: operand columns [j*C:(j+1)*C] hold the
        # input delayed by (k-1-j)*dilation rows; weight rows are laid out to
        # match ((k, C_in, C_out) reshaped to (k*C_in, C_out) in the wrapper).
        c = hin.shape[1]
        if k > 1:
            hist[pad_rows:pad_rows + rows, 0:c] = hin
        taps = []
        for j in range(k):
            s = (k - 1 - j) * dilation
            if s == 0:
                taps.append(hin)
            else:
                taps.append(hist[pad_rows - s:pad_rows - s + rows, 0:c])
        op = taps[0] if k == 1 else jnp.concatenate(taps, axis=1)
        acc = jnp.dot(op, w_ref[...], preferred_element_type=jnp.float32)
        return acc + b_ref[...]

    # TODO(synk): nn.Dropout is identity at inference; training-mode
    #             stochastic masking is not implemented.
    h_f32 = h.astype(jnp.float32)
    for (dilation, has_ds), wrefs in zip(layer_cfgs, layer_refs):
        w1, b1, w2, b2 = wrefs[:4]
        h1 = jnp.maximum(causal_conv(h, w1, b1, dilation),
                         0.0).astype(jnp.bfloat16)          # conv1+chomp+relu
        h2 = jnp.maximum(causal_conv(h1, w2, b2, dilation), 0.0)  # conv2+...
        if has_ds:                                           # 1x1 downsample
            wd, bd = wrefs[4], wrefs[5]
            res = jnp.dot(h, wd[...],
                          preferred_element_type=jnp.float32) + bd[...]
        else:
            res = h.astype(jnp.float32)
        h_f32 = jnp.maximum(h2 + res, 0.0)
        h = h_f32.astype(jnp.bfloat16)

    out = h_f32[halo_pad:, :] if use_halo else h_f32
    out_ref[...] = out.astype(out_ref.dtype)


# --------------------------------- wrapper ----------------------------------

def _pad_to(a, shape):
    pads = [(0, s - d) for d, s in zip(a.shape, shape)]
    if all(p == (0, 0) for p in pads):
        return a
    return jnp.pad(a, pads)


def _vmem_capacity_bytes(default=64 * 1024 * 1024):
    try:
        info = pltpu.get_tpu_info()
        cap = getattr(info, "vmem_capacity_bytes", None)
        if cap:
            return int(cap)
    except Exception:
        pass
    return default


def _choose_tile_t(T, halo_pad, target, min_tiles):
    t = min(target, _round_up(T, 8))
    t = _round_up(max(t, halo_pad, 8), 8)
    if min_tiles > 1:
        want = _round_up(-(-T // min_tiles), 8)
        t = _round_up(max(min(t, want), halo_pad, 8), 8)
    return t


def temporal_conv_net(x, params, kernel_size, *, tile_t=None, lane=128):
    """_TemporalConvNet.forward: (B, T, num_inputs) -> (B, T, num_channels[-1])."""
    B, T, c_in0 = x.shape
    out_dtype = x.dtype
    k = int(kernel_size)
    c_last = params[-1]["w1_kic"].shape[-1]

    # ---- static geometry ----
    c_in0_p = _round_up(c_in0, lane)
    halo = sum(2 * (k - 1) * int(p["dilation"]) for p in params)  # recept. field
    halo_pad = _round_up(halo, 8)
    max_shift = max(((k - 1) * int(p["dilation"]) for p in params), default=0)
    pad_rows = max(16, _round_up(max_shift, 16))

    # ---- VMEM-aware tiling policy ----
    vmem_cap = _vmem_capacity_bytes()
    target = 512 if vmem_cap <= 64 * 1024 * 1024 else 1024   # v7x vs v5e/v6e
    min_tiles = 2 if B == 1 else 1        # keep both v7x TensorCores busy
    if tile_t is None:
        tile_t = _choose_tile_t(T, halo_pad, target, min_tiles)
    else:
        tile_t = int(tile_t)
        if tile_t <= 0 or tile_t % 8:
            raise ValueError(f"tile_t={tile_t} must be a positive multiple of 8")
    tile_t = min(tile_t, _round_up(T, 8))
    n_t = -(-T // tile_t)
    use_halo = (n_t > 1) and (halo_pad > 0)
    if use_halo and tile_t < halo_pad:
        raise ValueError(f"tile_t={tile_t} must be >= halo_pad={halo_pad}")
    T_pad = n_t * tile_t
    rows = tile_t + (halo_pad if use_halo else 0)

    # ---- inputs: pad time (tail) + channels, carry in bf16 ----
    x_p = _pad_to(x, (B, T_pad, c_in0_p)).astype(jnp.bfloat16)

    args, in_specs = [], []
    if use_halo:
        # halo rows for tile t == the halo_pad rows preceding it (zeros at t=0)
        zeros_halo = jnp.zeros((B, halo_pad, c_in0_p), x_p.dtype)
        x_hist = jnp.concatenate([zeros_halo, x_p], axis=1)
        halo_src = x_hist[:, :T_pad, :].reshape(
            B, n_t, tile_t, c_in0_p)[:, :, :halo_pad, :]
        args.append(halo_src)
        in_specs.append(pl.BlockSpec((None, None, halo_pad, c_in0_p),
                                     lambda b, t: (b, t, 0, 0)))
    args.append(x_p)
    in_specs.append(pl.BlockSpec((None, tile_t, c_in0_p),
                                 lambda b, t: (b, t, 0)))

    # ---- per-layer weights: channel-pad, fuse taps, cast to bf16 ----
    # TODO(synk): weights use constant-index BlockSpecs; single-buffering them
    #             (pl.Buffered(1)) would halve their VMEM cost on v7x.
    layer_cfgs = []
    c_max = c_in0_p
    c_in, c_in_p = c_in0, c_in0_p
    for p in params:
        k_, ci, co = p["w1_kic"].shape
        assert k_ == k and ci == c_in
        co_p = _round_up(co, lane)
        c_max = max(c_max, co_p)
        has_ds = p["wd_ic"] is not None
        layer_cfgs.append((int(p["dilation"]), has_ds))

        w1 = _pad_to(p["w1_kic"], (k, c_in_p, co_p)).reshape(
            k * c_in_p, co_p).astype(jnp.bfloat16)
        b1 = _pad_to(p["b1"].reshape(1, co), (1, co_p)).astype(jnp.float32)
        w2 = _pad_to(p["w2_kic"], (k, co_p, co_p)).reshape(
            k * co_p, co_p).astype(jnp.bfloat16)
        b2 = _pad_to(p["b2"].reshape(1, co), (1, co_p)).astype(jnp.float32)
        args += [w1, b1, w2, b2]
        in_specs += [
            pl.BlockSpec((k * c_in_p, co_p), lambda b, t: (0, 0)),
            pl.BlockSpec((1, co_p), lambda b, t: (0, 0)),
            pl.BlockSpec((k * co_p, co_p), lambda b, t: (0, 0)),
            pl.BlockSpec((1, co_p), lambda b, t: (0, 0)),
        ]
        if has_ds:
            wd = _pad_to(p["wd_ic"], (c_in_p, co_p)).astype(jnp.bfloat16)
            bd = _pad_to(p["bd"].reshape(1, co), (1, co_p)).astype(jnp.float32)
            args += [wd, bd]
            in_specs += [
                pl.BlockSpec((c_in_p, co_p), lambda b, t: (0, 0)),
                pl.BlockSpec((1, co_p), lambda b, t: (0, 0)),
            ]
        c_in, c_in_p = co, co_p
    c_last_p = c_in_p

    kernel = functools.partial(
        _tcn_fused_kernel, layer_cfgs=tuple(layer_cfgs), kernel_size=k,
        halo_pad=halo_pad, pad_rows=pad_rows, use_halo=use_halo)

    grid_spec = pltpu.PrefetchScalarGridSpec(
        num_scalar_prefetch=0,
        grid=(B, n_t),
        in_specs=in_specs,
        out_specs=pl.BlockSpec((None, tile_t, c_last_p), lambda b, t: (b, t, 0)),
        scratch_shapes=[pltpu.VMEM((pad_rows + rows, c_max), jnp.bfloat16)],
    )

    vmem_limit = int(max(32 * 1024 * 1024,
                         min(int(vmem_cap * 0.75), 100 * 1024 * 1024)))
    out_p = pl.pallas_call(
        kernel,
        out_shape=jax.ShapeDtypeStruct((B, T_pad, c_last_p), out_dtype),
        grid_spec=grid_spec,
        compiler_params=pltpu.CompilerParams(
            dimension_semantics=("parallel", "parallel"),
            vmem_limit_bytes=vmem_limit),
    )(*args)

    return out_p[:, :T, :c_last]


# ----------------------- parameter setup (plain JAX glue) -------------------

def _weight_norm(v, g):
    # torch weight_norm default dim=0: per-output-channel L2 norm over (C_in, k)
    norm = jnp.sqrt(jnp.sum(v * v, axis=(1, 2), keepdims=True))
    return (g[:, None, None] / norm) * v


def init_tcn_params(key, num_inputs, num_channels, kernel_size):
    params = []
    c_in = num_inputs
    for i, c_out in enumerate(num_channels):
        dilation = 2 ** i
        key, k1, k2, k3, k4, k5, k6, k7, k8 = jax.random.split(key, 9)
        v1 = 0.1 * jax.random.normal(k1, (c_out, c_in, kernel_size), jnp.float32)
        g1 = 1.0 + 0.1 * jax.random.normal(k2, (c_out,), jnp.float32)
        b1 = 0.05 * jax.random.normal(k3, (c_out,), jnp.float32)
        v2 = 0.1 * jax.random.normal(k4, (c_out, c_out, kernel_size), jnp.float32)
        g2 = 1.0 + 0.1 * jax.random.normal(k5, (c_out,), jnp.float32)
        b2 = 0.05 * jax.random.normal(k6, (c_out,), jnp.float32)
        w1_oik = _weight_norm(v1, g1)            # (C_out, C_in, k)  torch layout
        w2_oik = _weight_norm(v2, g2)
        layer = {
            "dilation": dilation,
            "w1_oik": w1_oik, "b1": b1,
            "w2_oik": w2_oik, "b2": b2,
            "w1_kic": jnp.transpose(w1_oik, (2, 1, 0)),   # (k, C_in, C_out)
            "w2_kic": jnp.transpose(w2_oik, (2, 1, 0)),
            "wd_oik": None, "bd": None, "wd_ic": None,
        }
        if c_in != c_out:                                  # 1x1 downsample conv
            wd_oik = 0.1 * jax.random.normal(k7, (c_out, c_in, 1), jnp.float32)
            bd = 0.05 * jax.random.normal(k8, (c_out,), jnp.float32)
            layer["wd_oik"] = wd_oik
            layer["bd"] = bd
            layer["wd_ic"] = jnp.transpose(wd_oik[:, :, 0], (1, 0))
        params.append(layer)
        c_in = c_out
    return params


# -------------------------- pure-JAX reference (eval mode) ------------------

def reference_tcn(x, params, kernel_size):
    h = jnp.transpose(x, (0, 2, 1))              # x.transpose(1, 2) -> (B, C, T)
    for layer in params:
        d = layer["dilation"]
        pad = (kernel_size - 1) * d

        def conv(inp, w, b, dil, padding):
            out = jax.lax.conv_general_dilated(
                inp, w, window_strides=(1,), padding=padding,
                rhs_dilation=(dil,),
                dimension_numbers=("NCH", "OIH", "NCH"),
                precision=jax.lax.Precision.HIGHEST)
            return out + b[None, :, None]

        o = conv(h, layer["w1_oik"], layer["b1"], d, [(pad, pad)])
        o = jax.nn.relu(o[:, :, :o.shape[2] - pad])          # chomp1 + relu1
        o = conv(o, layer["w2_oik"], layer["b2"], d, [(pad, pad)])
        o = jax.nn.relu(o[:, :, :o.shape[2] - pad])          # chomp2 + relu2
        if layer["wd_oik"] is not None:
            res = conv(h, layer["wd_oik"], layer["bd"], 1, [(0, 0)])
        else:
            res = h
        h = jax.nn.relu(o + res)
    return jnp.transpose(h, (0, 2, 1))                       # back to (B, T, C)


if __name__ == "__main__":
    key = jax.random.PRNGKey(0)
    kernel_size = 2
    num_inputs = 4
    num_channels = [8, 8]      # layer 0 has a 1x1 downsample, layer 1 does not

    # Case 1: single time tile (no halo path).
    B, T = 2, 16
    key, kx, kp = jax.random.split(key, 3)
    x = jax.random.normal(kx, (B, T, num_inputs), jnp.float32)
    params = init_tcn_params(kp, num_inputs, num_channels, kernel_size)
    out = jax.block_until_ready(temporal_conv_net(x, params, kernel_size))
    ref = jax.block_until_ready(reference_tcn(x, params, kernel_size))
    assert out.shape == (B, T, num_channels[-1]), out.shape
    assert jnp.allclose(out, ref, atol=5e-2, rtol=5e-2), \
        float(jnp.max(jnp.abs(out - ref)))

    # Case 2: time-tiled path with a small causal halo
    # (T=64, tile_t=16, halo=6 -> halo_pad=8, rows per tile = 24).
    B2, T2 = 2, 64
    key, kx2, kp2 = jax.random.split(key, 3)
    x2 = jax.random.normal(kx2, (B2, T2, num_inputs), jnp.float32)
    params2 = init_tcn_params(kp2, num_inputs, num_channels, kernel_size)
    out2 = jax.block_until_ready(
        temporal_conv_net(x2, params2, kernel_size, tile_t=16))
    ref2 = jax.block_until_ready(reference_tcn(x2, params2, kernel_size))
    assert out2.shape == (B2, T2, num_channels[-1]), out2.shape
    assert jnp.allclose(out2, ref2, atol=5e-2, rtol=5e-2), \
        float(jnp.max(jnp.abs(out2 - ref2)))

    print("KERNEL_OK")
</pallas_src>

<mosaic_0001>
module attributes {stable_mosaic.version = 11 : i64} {
  func.func @_tcn_fused_kernel(%arg0: i32, %arg1: i32, %arg2: memref<1x16x128xbf16, #tpu.memory_space<vmem>>, %arg3: memref<256x128xbf16, #tpu.memory_space<vmem>>, %arg4: memref<1x128xf32, #tpu.memory_space<vmem>>, %arg5: memref<256x128xbf16, #tpu.memory_space<vmem>>, %arg6: memref<1x128xf32, #tpu.memory_space<vmem>>, %arg7: memref<128x128xbf16, #tpu.memory_space<vmem>>, %arg8: memref<1x128xf32, #tpu.memory_space<vmem>>, %arg9: memref<256x128xbf16, #tpu.memory_space<vmem>>, %arg10: memref<1x128xf32, #tpu.memory_space<vmem>>, %arg11: memref<256x128xbf16, #tpu.memory_space<vmem>>, %arg12: memref<1x128xf32, #tpu.memory_space<vmem>>, %arg13: memref<1x16x128xf32, #tpu.memory_space<vmem>>, %arg14: memref<32x128xbf16, #tpu.memory_space<vmem>>) attributes {dimension_semantics = [#tpu.dimension_semantics<parallel>, #tpu.dimension_semantics<parallel>], iteration_bounds = array<i64: 2, 1>, scalar_prefetch = 0 : i64, scratch_operands = 1 : i64, tpu.core_type = #tpu.core_type<tc>, window_params = [{transform_indices = @transform_0, window_bounds = array<i64: 1, 16, 128>}, {pipeline_mode = #tpu.pipeline_mode<synchronous>, transform_indices = @transform_1, window_bounds = array<i64: 256, 128>}, {pipeline_mode = #tpu.pipeline_mode<synchronous>, transform_indices = @transform_2, window_bounds = array<i64: 1, 128>}, {pipeline_mode = #tpu.pipeline_mode<synchronous>, transform_indices = @transform_3, window_bounds = array<i64: 256, 128>}, {pipeline_mode = #tpu.pipeline_mode<synchronous>, transform_indices = @transform_4, window_bounds = array<i64: 1, 128>}, {pipeline_mode = #tpu.pipeline_mode<synchronous>, transform_indices = @transform_5, window_bounds = array<i64: 128, 128>}, {pipeline_mode = #tpu.pipeline_mode<synchronous>, transform_indices = @transform_6, window_bounds = array<i64: 1, 128>}, {pipeline_mode = #tpu.pipeline_mode<synchronous>, transform_indices = @transform_7, window_bounds = array<i64: 256, 128>}, {pipeline_mode = #tpu.pipeline_mode<synchronous>, transform_indices = @transform_8, window_bounds = array<i64: 1, 128>}, {pipeline_mode = #tpu.pipeline_mode<synchronous>, transform_indices = @transform_9, window_bounds = array<i64: 256, 128>}, {pipeline_mode = #tpu.pipeline_mode<synchronous>, transform_indices = @transform_10, window_bounds = array<i64: 1, 128>}, {transform_indices = @transform_11, window_bounds = array<i64: 1, 16, 128>}]} {
    %cst = arith.constant 0.000000e+00 : bf16
    %0 = vector.broadcast %cst : bf16 to vector<16x128xbf16>
    %c0 = arith.constant 0 : index
    %c0_0 = arith.constant 0 : index
    %1 = vector.load %arg14[%c0, %c0_0] : memref<32x128xbf16, #tpu.memory_space<vmem>>, vector<16x128xbf16>
    tpu.vector_store %arg14[%c0, %c0_0], %0 {strides = array<i32>} : memref<32x128xbf16, #tpu.memory_space<vmem>>, vector<16x128xbf16>,
    %c0_1 = arith.constant 0 : index
    %c0_2 = arith.constant 0 : index
    %c0_3 = arith.constant 0 : index
    %2 = vector.load %arg2[%c0_1, %c0_2, %c0_3] : memref<1x16x128xbf16, #tpu.memory_space<vmem>>, vector<1x16x128xbf16>
    %3 = vector.shape_cast %2 : vector<1x16x128xbf16> to vector<16x128xbf16>
    %c16 = arith.constant 16 : index
    %c0_4 = arith.constant 0 : index
    %4 = vector.load %arg14[%c16, %c0_4] : memref<32x128xbf16, #tpu.memory_space<vmem>>, vector<16x128xbf16>
    tpu.vector_store %arg14[%c16, %c0_4], %3 {strides = array<i32>} : memref<32x128xbf16, #tpu.memory_space<vmem>>, vector<16x128xbf16>,
    %c15 = arith.constant 15 : index
    %c0_5 = arith.constant 0 : index
    %5 = vector.load %arg14[%c15, %c0_5] : memref<32x128xbf16, #tpu.memory_space<vmem>>, vector<16x128xbf16>
    %6 = tpu.concatenate %5, %3 in 1 : vector<16x128xbf16>, vector<16x128xbf16> -> vector<16x256xbf16>
    %c0_6 = arith.constant 0 : index
    %c0_7 = arith.constant 0 : index
    %7 = vector.load %arg3[%c0_6, %c0_7] : memref<256x128xbf16, #tpu.memory_space<vmem>>, vector<256x128xbf16>
    %cst_8 = arith.constant dense<0.000000e+00> : vector<16x128xf32>
    %8 = tpu.matmul %6, %7, %cst_8 {dimension_numbers = #tpu.dot_dimension_numbers<[1], [0], [0], [1], [0, 0, 1, 1], [], []>} : vector<16x256xbf16>, vector<256x128xbf16>, vector<16x128xf32> -> vector<16x128xf32>
    %c0_9 = arith.constant 0 : index
    %c0_10 = arith.constant 0 : index
    %9 = vector.load %arg4[%c0_9, %c0_10] : memref<1x128xf32, #tpu.memory_space<vmem>>, vector<1x128xf32>
    %10 = vector.broadcast %9 : vector<1x128xf32> to vector<16x128xf32>
    %11 = arith.addf %8, %10 : vector<16x128xf32>
    %cst_11 = arith.constant 0.000000e+00 : f32
    %12 = vector.broadcast %cst_11 : f32 to vector<16x128xf32>
    %13 = arith.maximumf %11, %12 : vector<16x128xf32>
    %14 = arith.truncf %13 : vector<16x128xf32> to vector<16x128xbf16>
    %c16_12 = arith.constant 16 : index
    %c0_13 = arith.constant 0 : index
    %15 = vector.load %arg14[%c16_12, %c0_13] : memref<32x128xbf16, #tpu.memory_space<vmem>>, vector<16x128xbf16>
    tpu.vector_store %arg14[%c16_12, %c0_13], %14 {strides = array<i32>} : memref<32x128xbf16, #tpu.memory_space<vmem>>, vector<16x128xbf16>,
    %c15_14 = arith.constant 15 : index
    %c0_15 = arith.constant 0 : index
    %16 = vector.load %arg14[%c15_14, %c0_15] : memref<32x128xbf16, #tpu.memory_space<vmem>>, vector<16x128xbf16>
    %17 = tpu.concatenate %16, %14 in 1 : vector<16x128xbf16>, vector<16x128xbf16> -> vector<16x256xbf16>
    %c0_16 = arith.constant 0 : index
    %c0_17 = arith.constant 0 : index
    %18 = vector.load %arg5[%c0_16, %c0_17] : memref<256x128xbf16, #tpu.memory_space<vmem>>, vector<256x128xbf16>
    %cst_18 = arith.constant dense<0.000000e+00> : vector<16x128xf32>
    %19 = tpu.matmul %17, %18, %cst_18 {dimension_numbers = #tpu.dot_dimension_numbers<[1], [0], [0], [1], [0, 0, 1, 1], [], []>} : vector<16x256xbf16>, vector<256x128xbf16>, vector<16x128xf32> -> vector<16x128xf32>
    %c0_19 = arith.constant 0 : index
    %c0_20 = arith.constant 0 : index
    %20 = vector.load %arg6[%c0_19, %c0_20] : memref<1x128xf32, #tpu.memory_space<vmem>>, vector<1x128xf32>
    %21 = vector.broadcast %20 : vector<1x128xf32> to vector<16x128xf32>
    %22 = arith.addf %19, %21 : vector<16x128xf32>
    %cst_21 = arith.constant 0.000000e+00 : f32
    %23 = vector.broadcast %cst_21 : f32 to vector<16x128xf32>
    %24 = arith.maximumf %22, %23 : vector<16x128xf32>
    %c0_22 = arith.constant 0 : index
    %c0_23 = arith.constant 0 : index
    %25 = vector.load %arg7[%c0_22, %c0_23] : memref<128x128xbf16, #tpu.memory_space<vmem>>, vector<128x128xbf16>
    %cst_24 = arith.constant dense<0.000000e+00> : vector<16x128xf32>
    %26 = tpu.matmul %3, %25, %cst_24 {dimension_numbers = #tpu.dot_dimension_numbers<[1], [0], [0], [1], [0, 0, 1, 1], [], []>} : vector<16x128xbf16>, vector<128x128xbf16>, vector<16x128xf32> -> vector<16x128xf32>
    %c0_25 = arith.constant 0 : index
    %c0_26 = arith.constant 0 : index
    %27 = vector.load %arg8[%c0_25, %c0_26] : memref<1x128xf32, #tpu.memory_space<vmem>>, vector<1x128xf32>
    %28 = vector.broadcast %27 : vector<1x128xf32> to vector<16x128xf32>
    %29 = arith.addf %26, %28 : vector<16x128xf32>
    %30 = arith.addf %24, %29 : vector<16x128xf32>
    %cst_27 = arith.constant 0.000000e+00 : f32
    %31 = vector.broadcast %cst_27 : f32 to vector<16x128xf32>
    %32 = arith.maximumf %30, %31 : vector<16x128xf32>
    %33 = arith.truncf %32 : vector<16x128xf32> to vector<16x128xbf16>
    %c16_28 = arith.constant 16 : index
    %c0_29 = arith.constant 0 : index
    %34 = vector.load %arg14[%c16_28, %c0_29] : memref<32x128xbf16, #tpu.memory_space<vmem>>, vector<16x128xbf16>
    tpu.vector_store %arg14[%c16_28, %c0_29], %33 {strides = array<i32>} : memref<32x128xbf16, #tpu.memory_space<vmem>>, vector<16x128xbf16>,
    %c14 = arith.constant 14 : index
    %c0_30 = arith.constant 0 : index
    %35 = vector.load %arg14[%c14, %c0_30] : memref<32x128xbf16, #tpu.memory_space<vmem>>, vector<16x128xbf16>
    %36 = tpu.concatenate %35, %33 in 1 : vector<16x128xbf16>, vector<16x128xbf16> -> vector<16x256xbf16>
    %c0_31 = arith.constant 0 : index
    %c0_32 = arith.constant 0 : index
    %37 = vector.load %arg9[%c0_31, %c0_32] : memref<256x128xbf16, #tpu.memory_space<vmem>>, vector<256x128xbf16>
    %cst_33 = arith.constant dense<0.000000e+00> : vector<16x128xf32>
    %38 = tpu.matmul %36, %37, %cst_33 {dimension_numbers = #tpu.dot_dimension_numbers<[1], [0], [0], [1], [0, 0, 1, 1], [], []>} : vector<16x256xbf16>, vector<256x128xbf16>, vector<16x128xf32> -> vector<16x128xf32>
    %c0_34 = arith.constant 0 : index
    %c0_35 = arith.constant 0 : index
    %39 = vector.load %arg10[%c0_34, %c0_35] : memref<1x128xf32, #tpu.memory_space<vmem>>, vector<1x128xf32>
    %40 = vector.broadcast %39 : vector<1x128xf32> to vector<16x128xf32>
    %41 = arith.addf %38, %40 : vector<16x128xf32>
    %cst_36 = arith.constant 0.000000e+00 : f32
    %42 = vector.broadcast %cst_36 : f32 to vector<16x128xf32>
    %43 = arith.maximumf %41, %42 : vector<16x128xf32>
    %44 = arith.truncf %43 : vector<16x128xf32> to vector<16x128xbf16>
    %c16_37 = arith.constant 16 : index
    %c0_38 = arith.constant 0 : index
    %45 = vector.load %arg14[%c16_37, %c0_38] : memref<32x128xbf16, #tpu.memory_space<vmem>>, vector<16x128xbf16>
    tpu.vector_store %arg14[%c16_37, %c0_38], %44 {strides = array<i32>} : memref<32x128xbf16, #tpu.memory_space<vmem>>, vector<16x128xbf16>,
    %c14_39 = arith.constant 14 : index
    %c0_40 = arith.constant 0 : index
    %46 = vector.load %arg14[%c14_39, %c0_40] : memref<32x128xbf16, #tpu.memory_space<vmem>>, vector<16x128xbf16>
    %47 = tpu.concatenate %46, %44 in 1 : vector<16x128xbf16>, vector<16x128xbf16> -> vector<16x256xbf16>
    %c0_41 = arith.constant 0 : index
    %c0_42 = arith.constant 0 : index
    %48 = vector.load %arg11[%c0_41, %c0_42] : memref<256x128xbf16, #tpu.memory_space<vmem>>, vector<256x128xbf16>
    %cst_43 = arith.constant dense<0.000000e+00> : vector<16x128xf32>
    %49 = tpu.matmul %47, %48, %cst_43 {dimension_numbers = #tpu.dot_dimension_numbers<[1], [0], [0], [1], [0, 0, 1, 1], [], []>} : vector<16x256xbf16>, vector<256x128xbf16>, vector<16x128xf32> -> vector<16x128xf32>
    %c0_44 = arith.constant 0 : index
    %c0_45 = arith.constant 0 : index
    %50 = vector.load %arg12[%c0_44, %c0_45] : memref<1x128xf32, #tpu.memory_space<vmem>>, vector<1x128xf32>
    %51 = vector.broadcast %50 : vector<1x128xf32> to vector<16x128xf32>
    %52 = arith.addf %49, %51 : vector<16x128xf32>
    %cst_46 = arith.constant 0.000000e+00 : f32
    %53 = vector.broadcast %cst_46 : f32 to vector<16x128xf32>
    %54 = arith.maximumf %52, %53 : vector<16x128xf32>
    %55 = arith.extf %33 : vector<16x128xbf16> to vector<16x128xf32>
    %56 = arith.addf %54, %55 : vector<16x128xf32>
    %cst_47 = arith.constant 0.000000e+00 : f32
    %57 = vector.broadcast %cst_47 : f32 to vector<16x128xf32>
    %58 = arith.maximumf %56, %57 : vector<16x128xf32>
    %c0_48 = arith.constant 0 : index
    %c0_49 = arith.constant 0 : index
    %c0_50 = arith.constant 0 : index
    %59 = vector.load %arg13[%c0_48, %c0_49, %c0_50] : memref<1x16x128xf32, #tpu.memory_space<vmem>>, vector<1x16x128xf32>
    %60 = vector.shape_cast %59 : vector<1x16x128xf32> to vector<16x128xf32>
    %61 = vector.shape_cast %58 : vector<16x128xf32> to vector<1x16x128xf32>
    tpu.vector_store %arg13[%c0_48, %c0_49, %c0_50], %61 {strides = array<i32>} : memref<1x16x128xf32, #tpu.memory_space<vmem>>, vector<1x16x128xf32>,
    return
  }
  func.func @transform_0(%arg0: i32, %arg1: i32) -> (i32, i32, i32) {
    %c0_i32 = arith.constant 0 : i32
    %c0_i32_0 = arith.constant 0 : i32
    return %arg0, %arg1, %c0_i32 : i32, i32, i32
  }
  func.func @transform_1(%arg0: i32, %arg1: i32) -> (i32, i32) {
    %c0_i32 = arith.constant 0 : i32
    %c0_i32_0 = arith.constant 0 : i32
    %c0_i32_1 = arith.constant 0 : i32
    return %c0_i32, %c0_i32_0 : i32, i32
  }
  func.func @transform_2(%arg0: i32, %arg1: i32) -> (i32, i32) {
    %c0_i32 = arith.constant 0 : i32
    %c0_i32_0 = arith.constant 0 : i32
    %c0_i32_1 = arith.constant 0 : i32
    return %c0_i32, %c0_i32_0 : i32, i32
  }
  func.func @transform_3(%arg0: i32, %arg1: i32) -> (i32, i32) {
    %c0_i32 = arith.constant 0 : i32
    %c0_i32_0 = arith.constant 0 : i32
    %c0_i32_1 = arith.constant 0 : i32
    return %c0_i32, %c0_i32_0 : i32, i32
  }
  func.func @transform_4(%arg0: i32, %arg1: i32) -> (i32, i32) {
    %c0_i32 = arith.constant 0 : i32
    %c0_i32_0 = arith.constant 0 : i32
    %c0_i32_1 = arith.constant 0 : i32
    return %c0_i32, %c0_i32_0 : i32, i32
  }
  func.func @transform_5(%arg0: i32, %arg1: i32) -> (i32, i32) {
    %c0_i32 = arith.constant 0 : i32
    %c0_i32_0 = arith.constant 0 : i32
    %c0_i32_1 = arith.constant 0 : i32
    return %c0_i32, %c0_i32_0 : i32, i32
  }
  func.func @transform_6(%arg0: i32, %arg1: i32) -> (i32, i32) {
    %c0_i32 = arith.constant 0 : i32
    %c0_i32_0 = arith.constant 0 : i32
    %c0_i32_1 = arith.constant 0 : i32
    return %c0_i32, %c0_i32_0 : i32, i32
  }
  func.func @transform_7(%arg0: i32, %arg1: i32) -> (i32, i32) {
    %c0_i32 = arith.constant 0 : i32
    %c0_i32_0 = arith.constant 0 : i32
    %c0_i32_1 = arith.constant 0 : i32
    return %c0_i32, %c0_i32_0 : i32, i32
  }
  func.func @transform_8(%arg0: i32, %arg1: i32) -> (i32, i32) {
    %c0_i32 = arith.constant 0 : i32
    %c0_i32_0 = arith.constant 0 : i32
    %c0_i32_1 = arith.constant 0 : i32
    return %c0_i32, %c0_i32_0 : i32, i32
  }
  func.func @transform_9(%arg0: i32, %arg1: i32) -> (i32, i32) {
    %c0_i32 = arith.constant 0 : i32
    %c0_i32_0 = arith.constant 0 : i32
    %c0_i32_1 = arith.constant 0 : i32
    return %c0_i32, %c0_i32_0 : i32, i32
  }
  func.func @transform_10(%arg0: i32, %arg1: i32) -> (i32, i32) {
    %c0_i32 = arith.constant 0 : i32
    %c0_i32_0 = arith.constant 0 : i32
    %c0_i32_1 = arith.constant 0 : i32
    return %c0_i32, %c0_i32_0 : i32, i32
  }
  func.func @transform_11(%arg0: i32, %arg1: i32) -> (i32, i32, i32) {
    %c0_i32 = arith.constant 0 : i32
    %c0_i32_0 = arith.constant 0 : i32
    return %arg0, %arg1, %c0_i32 : i32, i32, i32
  }
}

</mosaic_0001>

<llo_original>
// kernel: tpu_custom_call.1
$region0: #{tpu_custom_call.1}
  #allocation0 [shape = 'u32[]', space=smem, size = 0x4, offset = 0x4, fixed_abs, tag = 'smem constant byte address 0x4 - core index']
  #allocation1 [shape = 'u32[144,128]{1,0:T(1,128)}', space=vmem, size = 0x12000, scoped, tag = 'internal scratch']
  #allocation2 [shape = 'bf16[32,128]{1,0:T(8,128)(2,1)}', space=vmem, size = 0x2000, scoped, tag = 'scratch operand']
  %s0 = inlined_call_operand.hbm [shape: bf16[2,16,128], index: 0, kind: input, shape index: {}]
  %s1 = inlined_call_operand.hbm [shape: bf16[256,128], index: 1, kind: input, shape index: {}]
  %s2 = inlined_call_operand.vmem [shape: f32[1,128], index: 2, kind: input, shape index: {}]
  %s3 = inlined_call_operand.hbm [shape: bf16[256,128], index: 3, kind: input, shape index: {}]
  %s4 = inlined_call_operand.vmem [shape: f32[1,128], index: 4, kind: input, shape index: {}]
  %s5 = inlined_call_operand.hbm [shape: bf16[128,128], index: 5, kind: input, shape index: {}]
  %s6 = inlined_call_operand.vmem [shape: f32[1,128], index: 6, kind: input, shape index: {}]
  %s7 = inlined_call_operand.hbm [shape: bf16[256,128], index: 7, kind: input, shape index: {}]
  %s8 = inlined_call_operand.vmem [shape: f32[1,128], index: 8, kind: input, shape index: {}]
  %s9 = inlined_call_operand.hbm [shape: bf16[256,128], index: 9, kind: input, shape index: {}]
  %s10 = inlined_call_operand.vmem [shape: f32[1,128], index: 10, kind: input, shape index: {}]
  %s11 = inlined_call_operand.hbm [shape: f32[2,16,128], index: 11, kind: output, shape index: {}]
  %s12 = sld [smem:[#allocation0]]
  $region101: #{tpu_custom_call.1} parent=0
    _
  %s14 = ssub.s32 1, %s12
  %s15 = scalar_select 0, %s14, %s12
  $region1: #{tpu_custom_call.1} parent=0
    #allocation3 [shape = 'u8[8192]{0}', space=vmem, size = 0x2000, scoped, tag = 'input window, operand 0']
    #allocation4 [shape = 's32[2]{0}', space=sflag, size = 0x8, scoped, tag = 'scoped memory for tpu_custom_call.1']
    #allocation5 [shape = 's32[2]{0}', space=sflag, size = 0x8, scoped, tag = 'scoped memory for tpu_custom_call.1']
    #allocation6 [shape = 'u8[65536]{0}', space=vmem, size = 0x10000, scoped, tag = 'input window, operand 1, single buffered']
    #allocation7 [shape = 's32[1]{0}', space=sflag, size = 0x4, scoped, tag = 'scoped memory for tpu_custom_call.1']
    #allocation8 [shape = 'u8[65536]{0}', space=vmem, size = 0x10000, scoped, tag = 'input window, operand 3, single buffered']
    #allocation9 [shape = 'u8[32768]{0}', space=vmem, size = 0x8000, scoped, tag = 'input window, operand 5, single buffered']
    #allocation10 [shape = 's32[1]{0}', space=sflag, size = 0x4, scoped, tag = 'scoped memory for tpu_custom_call.1']
    #allocation11 [shape = 'u8[65536]{0}', space=vmem, size = 0x10000, scoped, tag = 'input window, operand 7, single buffered']
    #allocation12 [shape = 'u8[65536]{0}', space=vmem, size = 0x10000, scoped, tag = 'input window, operand 9, single buffered']
    #allocation13 [shape = 's32[1]{0}', space=sflag, size = 0x4, scoped, tag = 'scoped memory for tpu_custom_call.1']
    #allocation14 [shape = 'u8[16384]{0}', space=vmem, size = 0x4000, scoped, tag = 'output window, operand 0']
    %16 = vsyncpa [#allocation4], 0
    %s17 = scalar_lea.sflag [#allocation4], 1
    %18 = vsyncpa %s17, 0
    %19 = vsyncpa [#allocation7], 0
    %20 = vsyncpa [#allocation10], 0
    %21 = vsyncpa [#allocation13], 0
    %22 = vsyncpa [#allocation5], 0
    %s23 = scalar_lea.sflag [#allocation5], 1
    %24 = vsyncpa %s23, 0
    loop: start=0, step=1, limit=4
    $region2: #{tpu_custom_call.1} parent=1 // loop_pre_header
      _
    $region3: #{tpu_custom_call.1} parent=1 // loop_header
      %s26 = sphi 0, %s30
      %p27 = scmp.ge.s32.totalorder %s26, 4
      %s33 = sphi 0, %s45
      %s34 = sphi 0, %s41
      %s35 = sphi 0, %s33
      %s36 = sphi 0, %s34
      %s37 = sphi 0, %s35
      %s38 = sphi 0, %s36
      %s50 = sphi 0, %s52
      %s53 = sphi 0, %s50
      %s54 = sphi 0, %s53
      %s70 = sphi 0, %s54
      %s74 = sphi 0, %s74
      %s76 = sphi 0, %s74
      %s77 = sphi 0, %s76
      %s91 = sphi 0, %s77
      %s95 = sphi 0, %s95
      %s97 = sphi 0, %s95
      %s98 = sphi 0, %s97
      %s112 = sphi 0, %s98
      %s116 = sphi 0, %s116
      %s118 = sphi 0, %s116
      %s119 = sphi 0, %s118
      %s133 = sphi 0, %s119
      %s137 = sphi 0, %s137
      %s139 = sphi 0, %s137
      %s140 = sphi 0, %s139
      %s154 = sphi 0, %s140
      %s158 = sphi 0, %s158
      %s160 = sphi 0, %s158
      %s161 = sphi 0, %s160
      %s175 = sphi 0, %s161
      %s179 = sphi 0, %s179
      %s181 = sphi 0, %s179
      %s182 = sphi 0, %s181
      %s196 = sphi 0, %s182
      %s200 = sphi 0, %s200
      %s202 = sphi 0, %s200
      %s203 = sphi 0, %s202
      %s217 = sphi 0, %s203
      %s221 = sphi 0, %s221
      %s223 = sphi 0, %s221
      %s224 = sphi 0, %s223
      %s238 = sphi 0, %s224
      %s242 = sphi 0, %s242
      %s244 = sphi 0, %s242
      %s245 = sphi 0, %s244
      %s259 = sphi 0, %s245
      %s263 = sphi 0, %s263
      %s265 = sphi 0, %s263
      %s266 = sphi 0, %s265
      %s280 = sphi 0, %s266
      %s288 = sphi 0, %s290
      %s291 = sphi 0, %s288
      %s292 = sphi 0, %s291
      %s308 = sphi 0, %s292
    $region4: #{tpu_custom_call.1} parent=1 // loop_header_branch
      %29 = sbr.rel (%p27) target = $region8
    $region5: #{tpu_custom_call.1} parent=1 // loop_body
      %s31 = ssub.s32 %s26, 1
      %s32 = ssub.s32 %s26, 2
      %s39 = sadd.s32 1, %s34
      %p40 = scmp.ge.s32.totalorder %s39, 1
      %s41 = scalar_select %p40, 0, %s39
      %s42 = sadd.s32 1, %s33
      %s43 = scalar_select %p40, %s42, %s33
      %p44 = scmp.ge.s32.totalorder %s43, 2
      %s45 = scalar_select %p44, 0, %s43
      %s46 = ssub.s32 %s33, %s45
      %s47 = ssub.s32 %s34, %s41
      %s48 = sor.u32 %s46, %s47
      %p49 = scmp.eq.s32.totalorder %s48, 0
      %s51 = sadd.s32 %s50, 1
      %s52 = scalar_select %p49, %s50, %s51
      %p55 = pneg %p49
      %p56 = scmp.eq.s32.totalorder %s26, 1
      %p57 = por %p55, %p56
      %p58 = scmp.ne.s32.totalorder %s50, %s53
      %p59 = scmp.eq.s32.totalorder %s26, 0
      %p60 = por %p58, %p59
      %p61 = scmp.ne.s32.totalorder %s50, %s53
      %p62 = scmp.eq.s32.totalorder %s31, 1
      %p63 = por %p61, %p62
      %p64 = scmp.ne.s32.totalorder %s53, %s54
      %p65 = scmp.eq.s32.totalorder %s31, 0
      %p66 = por %p64, %p65
      %p67 = scmp.ne.s32.totalorder %s53, %s54
      %p68 = scmp.eq.s32.totalorder %s32, 1
      %p69 = por %p67, %p68
      %p71 = scmp.ne.s32.totalorder %s54, %s70
      %p72 = scmp.eq.s32.totalorder %s32, 0
      %p73 = por %p71, %p72
      %s75 = sadd.s32 %s74, 1
      %p78 = scmp.eq.s32.totalorder %s26, 1
      %p79 = scmp.ne.s32.totalorder %s74, %s76
      %p80 = scmp.eq.s32.totalorder %s26, 0
      %p81 = por %p79, %p80
      %p82 = scmp.ne.s32.totalorder %s74, %s76
      %p83 = scmp.eq.s32.totalorder %s31, 1
      %p84 = por %p82, %p83
      %p85 = scmp.ne.s32.totalorder %s76, %s77
      %p86 = scmp.eq.s32.totalorder %s31, 0
      %p87 = por %p85, %p86
      %p88 = scmp.ne.s32.totalorder %s76, %s77
      %p89 = scmp.eq.s32.totalorder %s32, 1
      %p90 = por %p88, %p89
      %p92 = scmp.ne.s32.totalorder %s77, %s91
      %p93 = scmp.eq.s32.totalorder %s32, 0
      %p94 = por %p92, %p93
      %s96 = sadd.s32 %s95, 1
      %p99 = scmp.eq.s32.totalorder %s26, 1
      %p100 = scmp.ne.s32.totalorder %s95, %s97
      %p101 = scmp.eq.s32.totalorder %s26, 0
      %p102 = por %p100, %p101
      %p103 = scmp.ne.s32.totalorder %s95, %s97
      %p104 = scmp.eq.s32.totalorder %s31, 1
      %p105 = por %p103, %p104
      %p106 = scmp.ne.s32.totalorder %s97, %s98
      %p107 = scmp.eq.s32.totalorder %s31, 0
      %p108 = por %p106, %p107
      %p109 = scmp.ne.s32.totalorder %s97, %s98
      %p110 = scmp.eq.s32.totalorder %s32, 1
      %p111 = por %p109, %p110
      %p113 = scmp.ne.s32.totalorder %s98, %s112
      %p114 = scmp.eq.s32.totalorder %s32, 0
      %p115 = por %p113, %p114
      %s117 = sadd.s32 %s116, 1
      %p120 = scmp.eq.s32.totalorder %s26, 1
      %p121 = scmp.ne.s32.totalorder %s116, %s118
      %p122 = scmp.eq.s32.totalorder %s26, 0
      %p123 = por %p121, %p122
      %p124 = scmp.ne.s32.totalorder %s116, %s118
      %p125 = scmp.eq.s32.totalorder %s31, 1
      %p126 = por %p124, %p125
      %p127 = scmp.ne.s32.totalorder %s118, %s119
      %p128 = scmp.eq.s32.totalorder %s31, 0
      %p129 = por %p127, %p128
      %p130 = scmp.ne.s32.totalorder %s118, %s119
      %p131 = scmp.eq.s32.totalorder %s32, 1
      %p132 = por %p130, %p131
      %p134 = scmp.ne.s32.totalorder %s119, %s133
      %p135 = scmp.eq.s32.totalorder %s32, 0
      %p136 = por %p134, %p135
      %s138 = sadd.s32 %s137, 1
      %p141 = scmp.eq.s32.totalorder %s26, 1
      %p142 = scmp.ne.s32.totalorder %s137, %s139
      %p143 = scmp.eq.s32.totalorder %s26, 0
      %p144 = por %p142, %p143
      %p145 = scmp.ne.s32.totalorder %s137, %s139
      %p146 = scmp.eq.s32.totalorder %s31, 1
      %p147 = por %p145, %p146
      %p148 = scmp.ne.s32.totalorder %s139, %s140
      %p149 = scmp.eq.s32.totalorder %s31, 0
      %p150 = por %p148, %p149
      %p151 = scmp.ne.s32.totalorder %s139, %s140
      %p152 = scmp.eq.s32.totalorder %s32, 1
      %p153 = por %p151, %p152
      %p155 = scmp.ne.s32.totalorder %s140, %s154
      %p156 = scmp.eq.s32.totalorder %s32, 0
      %p157 = por %p155, %p156
      %s159 = sadd.s32 %s158, 1
      %p162 = scmp.eq.s32.totalorder %s26, 1
      %p163 = scmp.ne.s32.totalorder %s158, %s160
      %p164 = scmp.eq.s32.totalorder %s26, 0
      %p165 = por %p163, %p164
      %p166 = scmp.ne.s32.totalorder %s158, %s160
      %p167 = scmp.eq.s32.totalorder %s31, 1
      %p168 = por %p166, %p167
      %p169 = scmp.ne.s32.totalorder %s160, %s161
      %p170 = scmp.eq.s32.totalorder %s31, 0
      %p171 = por %p169, %p170
      %p172 = scmp.ne.s32.totalorder %s160, %s161
      %p173 = scmp.eq.s32.totalorder %s32, 1
      %p174 = por %p172, %p173
      %p176 = scmp.ne.s32.totalorder %s161, %s175
      %p177 = scmp.eq.s32.totalorder %s32, 0
      %p178 = por %p176, %p177
      %s180 = sadd.s32 %s179, 1
      %p183 = scmp.eq.s32.totalorder %s26, 1
      %p184 = scmp.ne.s32.totalorder %s179, %s181
      %p185 = scmp.eq.s32.totalorder %s26, 0
      %p186 = por %p184, %p185
      %p187 = scmp.ne.s32.totalorder %s179, %s181
      %p188 = scmp.eq.s32.totalorder %s31, 1
      %p189 = por %p187, %p188
      %p190 = scmp.ne.s32.totalorder %s181, %s182
      %p191 = scmp.eq.s32.totalorder %s31, 0
      %p192 = por %p190, %p191
      %p193 = scmp.ne.s32.totalorder %s181, %s182
      %p194 = scmp.eq.s32.totalorder %s32, 1
      %p195 = por %p193, %p194
      %p197 = scmp.ne.s32.totalorder %s182, %s196
      %p198 = scmp.eq.s32.totalorder %s32, 0
      %p199 = por %p197, %p198
      %s201 = sadd.s32 %s200, 1
      %p204 = scmp.eq.s32.totalorder %s26, 1
      %p205 = scmp.ne.s32.totalorder %s200, %s202
      %p206 = scmp.eq.s32.totalorder %s26, 0
      %p207 = por %p205, %p206
      %p208 = scmp.ne.s32.totalorder %s200, %s202
      %p209 = scmp.eq.s32.totalorder %s31, 1
      %p210 = por %p208, %p209
      %p211 = scmp.ne.s32.totalorder %s202, %s203
      %p212 = scmp.eq.s32.totalorder %s31, 0
      %p213 = por %p211, %p212
      %p214 = scmp.ne.s32.totalorder %s202, %s203
      %p215 = scmp.eq.s32.totalorder %s32, 1
      %p216 = por %p214, %p215
      %p218 = scmp.ne.s32.totalorder %s203, %s217
      %p219 = scmp.eq.s32.totalorder %s32, 0
      %p220 = por %p218, %p219
      %s222 = sadd.s32 %s221, 1
      %p225 = scmp.eq.s32.totalorder %s26, 1
      %p226 = scmp.ne.s32.totalorder %s221, %s223
      %p227 = scmp.eq.s32.totalorder %s26, 0
      %p228 = por %p226, %p227
      %p229 = scmp.ne.s32.totalorder %s221, %s223
      %p230 = scmp.eq.s32.totalorder %s31, 1
      %p231 = por %p229, %p230
      %p232 = scmp.ne.s32.totalorder %s223, %s224
      %p233 = scmp.eq.s32.totalorder %s31, 0
      %p234 = por %p232, %p233
      %p235 = scmp.ne.s32.totalorder %s223, %s224
      %p236 = scmp.eq.s32.totalorder %s32, 1
      %p237 = por %p235, %p236
      %p239 = scmp.ne.s32.totalorder %s224, %s238
      %p240 = scmp.eq.s32.totalorder %s32, 0
      %p241 = por %p239, %p240
      %s243 = sadd.s32 %s242, 1
      %p246 = scmp.eq.s32.totalorder %s26, 1
      %p247 = scmp.ne.s32.totalorder %s242, %s244
      %p248 = scmp.eq.s32.totalorder %s26, 0
      %p249 = por %p247, %p248
      %p250 = scmp.ne.s32.totalorder %s242, %s244
      %p251 = scmp.eq.s32.totalorder %s31, 1
      %p252 = por %p250, %p251
      %p253 = scmp.ne.s32.totalorder %s244, %s245
      %p254 = scmp.eq.s32.totalorder %s31, 0
      %p255 = por %p253, %p254
      %p256 = scmp.ne.s32.totalorder %s244, %s245
      %p257 = scmp.eq.s32.totalorder %s32, 1
      %p258 = por %p256, %p257
      %p260 = scmp.ne.s32.totalorder %s245, %s259
      %p261 = scmp.eq.s32.totalorder %s32, 0
      %p262 = por %p260, %p261
      %s264 = sadd.s32 %s263, 1
      %p267 = scmp.eq.s32.totalorder %s26, 1
      %p268 = scmp.ne.s32.totalorder %s263, %s265
      %p269 = scmp.eq.s32.totalorder %s26, 0
      %p270 = por %p268, %p269
      %p271 = scmp.ne.s32.totalorder %s263, %s265
      %p272 = scmp.eq.s32.totalorder %s31, 1
      %p273 = por %p271, %p272
      %p274 = scmp.ne.s32.totalorder %s265, %s266
      %p275 = scmp.eq.s32.totalorder %s31, 0
      %p276 = por %p274, %p275
      %p277 = scmp.ne.s32.totalorder %s265, %s266
      %p278 = scmp.eq.s32.totalorder %s32, 1
      %p279 = por %p277, %p278
      %p281 = scmp.ne.s32.totalorder %s266, %s280
      %p282 = scmp.eq.s32.totalorder %s32, 0
      %p283 = por %p281, %p282
      %s284 = ssub.s32 %s33, %s45
      %s285 = ssub.s32 %s34, %s41
      %s286 = sor.u32 %s284, %s285
      %p287 = scmp.eq.s32.totalorder %s286, 0
      %s289 = sadd.s32 %s288, 1
      %s290 = scalar_select %p287, %s288, %s289
      %p293 = pneg %p287
      %p294 = scmp.eq.s32.totalorder %s26, 1
      %p295 = por %p293, %p294
      %p296 = scmp.ne.s32.totalorder %s288, %s291
      %p297 = scmp.eq.s32.totalorder %s26, 0
      %p298 = por %p296, %p297
      %p299 = scmp.ne.s32.totalorder %s288, %s291
      %p300 = scmp.eq.s32.totalorder %s31, 1
      %p301 = por %p299, %p300
      %p302 = scmp.ne.s32.totalorder %s291, %s292
      %p303 = scmp.eq.s32.totalorder %s31, 0
      %p304 = por %p302, %p303
      %p305 = scmp.ne.s32.totalorder %s291, %s292
      %p306 = scmp.eq.s32.totalorder %s32, 1
      %p307 = por %p305, %p306
      %p309 = scmp.ne.s32.totalorder %s292, %s308
      %p310 = scmp.eq.s32.totalorder %s32, 0
      %p311 = por %p309, %p310
      %p312 = scmp.le.s32.totalorder 1, %s26
      %p313 = scmp.lt.s32.totalorder %s26, 3
      %p314 = pnand %p312, %p313
      %p315 = pneg %p314
      // Predicated region
      $region9: #{tpu_custom_call.1} parent=5 // pred_check
        _
      $region10: #{tpu_custom_call.1} parent=5 // pred_check_branch
        %317 = sbr.rel (%p314) target = $region12
      $region11: #{tpu_custom_call.1} parent=5 // pred_region
        %s318 = ssub.s32 %s26, 1
        // Predicated region
        $region13: #{tpu_custom_call.1} parent=11 // pred_check
          %p319 = pneg %p87
        $region14: #{tpu_custom_call.1} parent=11 // pred_check_branch
          %321 = sbr.rel (%p319) target = $region16
        $region15: #{tpu_custom_call.1} parent=11 // pred_region
          %s323 = ssub.s32 2048, 2048
          %324 = vsyncadd [#allocation7], %s323
          %s325 = sshll.u32 [#allocation6], 4
          %s326 = int_to_ptr.vmem [resolvable:$true] %s325
          %331 = dma.hbm_to_vmem [thread:$0]  %s1, 2048, %s326, [#allocation7], 64, 64, 4
        $region16: #{tpu_custom_call.1} parent=11 // pred_fallthru
          _
        // Predicated region
        $region17: #{tpu_custom_call.1} parent=11 // pred_check
          %p332 = pneg %p108
        $region18: #{tpu_custom_call.1} parent=11 // pred_check_branch
          %334 = sbr.rel (%p332) target = $region20
        $region19: #{tpu_custom_call.1} parent=11 // pred_region
          _
        $region20: #{tpu_custom_call.1} parent=11 // pred_fallthru
          _
        // Predicated region
        $region21: #{tpu_custom_call.1} parent=11 // pred_check
          %p335 = pneg %p129
        $region22: #{tpu_custom_call.1} parent=11 // pred_check_branch
          %337 = sbr.rel (%p335) target = $region24
        $region23: #{tpu_custom_call.1} parent=11 // pred_region
          %s339 = ssub.s32 2048, 2048
          %340 = vsyncadd [#allocation7], %s339
          %s341 = sshll.u32 [#allocation8], 4
          %s342 = int_to_ptr.vmem [resolvable:$true] %s341
          %347 = dma.hbm_to_vmem [thread:$0]  %s3, 2048, %s342, [#allocation7], 64, 64, 4
        $region24: #{tpu_custom_call.1} parent=11 // pred_fallthru
          _
        // Predicated region
        $region25: #{tpu_custom_call.1} parent=11 // pred_check
          %p348 = pneg %p150
        $region26: #{tpu_custom_call.1} parent=11 // pred_check_branch
          %350 = sbr.rel (%p348) target = $region28
        $region27: #{tpu_custom_call.1} parent=11 // pred_region
          _
        $region28: #{tpu_custom_call.1} parent=11 // pred_fallthru
          _
        // Predicated region
        $region29: #{tpu_custom_call.1} parent=11 // pred_check
          %p351 = pneg %p171
        $region30: #{tpu_custom_call.1} parent=11 // pred_check_branch
          %353 = sbr.rel (%p351) target = $region32
        $region31: #{tpu_custom_call.1} parent=11 // pred_region
          %s355 = ssub.s32 1024, 1024
          %356 = vsyncadd [#allocation10], %s355
          %s357 = sshll.u32 [#allocation9], 4
          %s358 = int_to_ptr.vmem [resolvable:$true] %s357
          %363 = dma.hbm_to_vmem [thread:$0]  %s5, 1024, %s358, [#allocation10], 64, 64, 4
        $region32: #{tpu_custom_call.1} parent=11 // pred_fallthru
          _
        // Predicated region
        $region33: #{tpu_custom_call.1} parent=11 // pred_check
          %p364 = pneg %p192
        $region34: #{tpu_custom_call.1} parent=11 // pred_check_branch
          %366 = sbr.rel (%p364) target = $region36
        $region35: #{tpu_custom_call.1} parent=11 // pred_region
          _
        $region36: #{tpu_custom_call.1} parent=11 // pred_fallthru
          _
        // Predicated region
        $region37: #{tpu_custom_call.1} parent=11 // pred_check
          %p367 = pneg %p213
        $region38: #{tpu_custom_call.1} parent=11 // pred_check_branch
          %369 = sbr.rel (%p367) target = $region40
        $region39: #{tpu_custom_call.1} parent=11 // pred_region
          %s371 = ssub.s32 2048, 2048
          %372 = vsyncadd [#allocation10], %s371
          %s373 = sshll.u32 [#allocation11], 4
          %s374 = int_to_ptr.vmem [resolvable:$true] %s373
          %379 = dma.hbm_to_vmem [thread:$0]  %s7, 2048, %s374, [#allocation10], 64, 64, 4
        $region40: #{tpu_custom_call.1} parent=11 // pred_fallthru
          _
        // Predicated region
        $region41: #{tpu_custom_call.1} parent=11 // pred_check
          %p380 = pneg %p234
        $region42: #{tpu_custom_call.1} parent=11 // pred_check_branch
          %382 = sbr.rel (%p380) target = $region44
        $region43: #{tpu_custom_call.1} parent=11 // pred_region
          _
        $region44: #{tpu_custom_call.1} parent=11 // pred_fallthru
          _
        // Predicated region
        $region45: #{tpu_custom_call.1} parent=11 // pred_check
          %p383 = pneg %p255
        $region46: #{tpu_custom_call.1} parent=11 // pred_check_branch
          %385 = sbr.rel (%p383) target = $region48
        $region47: #{tpu_custom_call.1} parent=11 // pred_region
          %s387 = ssub.s32 2048, 2048
          %388 = vsyncadd [#allocation13], %s387
          %s389 = sshll.u32 [#allocation12], 4
          %s390 = int_to_ptr.vmem [resolvable:$true] %s389
          %395 = dma.hbm_to_vmem [thread:$0]  %s9, 2048, %s390, [#allocation13], 64, 64, 4
        $region48: #{tpu_custom_call.1} parent=11 // pred_fallthru
          _
        // Predicated region
        $region49: #{tpu_custom_call.1} parent=11 // pred_check
          %p396 = pneg %p276
        $region50: #{tpu_custom_call.1} parent=11 // pred_check_branch
          %398 = sbr.rel (%p396) target = $region52
        $region51: #{tpu_custom_call.1} parent=11 // pred_region
          _
        $region52: #{tpu_custom_call.1} parent=11 // pred_fallthru
          _
      $region12: #{tpu_custom_call.1} parent=5 // pred_fallthru
        _
      %p399 = scmp.lt.s32.totalorder %s26, 2
      // Predicated region
      $region53: #{tpu_custom_call.1} parent=5 // pred_check
        %p400 = pneg %p399
      $region54: #{tpu_custom_call.1} parent=5 // pred_check_branch
        %402 = sbr.rel (%p400) target = $region56
      $region55: #{tpu_custom_call.1} parent=5 // pred_region
        // Predicated region
        $region57: #{tpu_custom_call.1} parent=55 // pred_check
          %p403 = pneg %p60
        $region58: #{tpu_custom_call.1} parent=55 // pred_check_branch
          %405 = sbr.rel (%p403) target = $region60
        $region59: #{tpu_custom_call.1} parent=55 // pred_region
          %s406 = sand.u32 %s50, 1
          %s407 = scalar_lea.sflag [#allocation4], %s406
          %s408 = sand.u32 %s50, 1
          %s409 = smul.addr %s408, 8
          %s410 = scalar_lea.vmem [#allocation3], %s409
          %s411 = smul.u32 2, %s34
          %s413 = ssub.s32 128, 128
          %414 = vsyncadd %s407, %s413
          %s415 = smul.addr %s33, 2
          %s416 = sadd.s32 %s411, %s415
          %s417 = smul.addr %s416, 64
          %s418 = scalar_lea.hbm %s0, %s417
          %s419 = sshll.u32 %s410, 4
          %s420 = int_to_ptr.vmem [resolvable:$true] %s419
          %425 = dma.hbm_to_vmem [thread:$0]  %s418, 128, %s420, %s407, 64, 64, 4
        $region60: #{tpu_custom_call.1} parent=55 // pred_fallthru
          _
      $region56: #{tpu_custom_call.1} parent=5 // pred_fallthru
        _
      %p426 = scmp.le.s32.totalorder 1, %s26
      %p427 = scmp.lt.s32.totalorder %s26, 3
      %p428 = pnand %p426, %p427
      %p429 = pneg %p428
      // Predicated region
      $region61: #{tpu_custom_call.1} parent=5 // pred_check
        _
      $region62: #{tpu_custom_call.1} parent=5 // pred_check_branch
        %431 = sbr.rel (%p428) target = $region64
      $region63: #{tpu_custom_call.1} parent=5 // pred_region
        %s432 = ssub.s32 %s26, 1
        %s433 = sand.u32 %s53, 1
        %s434 = scalar_lea.sflag [#allocation4], %s433
        %s435 = sand.u32 %s53, 1
        %s436 = smul.addr %s435, 8
        %s437 = scalar_lea.vmem [#allocation3], %s436
        // Predicated region
        $region65: #{tpu_custom_call.1} parent=63 // pred_check
          %p438 = pneg %p66
        $region66: #{tpu_custom_call.1} parent=63 // pred_check_branch
          %440 = sbr.rel (%p438) target = $region68
        $region67: #{tpu_custom_call.1} parent=63 // pred_region
          %441 = dma.done %s434, 128
        $region68: #{tpu_custom_call.1} parent=63 // pred_fallthru
          _
        // Predicated region
        $region69: #{tpu_custom_call.1} parent=63 // pred_check
          %p442 = pneg %p87
        $region70: #{tpu_custom_call.1} parent=63 // pred_check_branch
          %444 = sbr.rel (%p442) target = $region72
        $region71: #{tpu_custom_call.1} parent=63 // pred_region
          %445 = dma.done [#allocation7], 2048
        $region72: #{tpu_custom_call.1} parent=63 // pred_fallthru
          _
        // Predicated region
        $region73: #{tpu_custom_call.1} parent=63 // pred_check
          %p446 = pneg %p129
        $region74: #{tpu_custom_call.1} parent=63 // pred_check_branch
          %448 = sbr.rel (%p446) target = $region76
        $region75: #{tpu_custom_call.1} parent=63 // pred_region
          %449 = dma.done [#allocation7], 2048
        $region76: #{tpu_custom_call.1} parent=63 // pred_fallthru
          _
        // Predicated region
        $region77: #{tpu_custom_call.1} parent=63 // pred_check
          %p450 = pneg %p171
        $region78: #{tpu_custom_call.1} parent=63 // pred_check_branch
          %452 = sbr.rel (%p450) target = $region80
        $region79: #{tpu_custom_call.1} parent=63 // pred_region
          %453 = dma.done [#allocation10], 1024
        $region80: #{tpu_custom_call.1} parent=63 // pred_fallthru
          _
        // Predicated region
        $region81: #{tpu_custom_call.1} parent=63 // pred_check
          %p454 = pneg %p213
        $region82: #{tpu_custom_call.1} parent=63 // pred_check_branch
          %456 = sbr.rel (%p454) target = $region84
        $region83: #{tpu_custom_call.1} parent=63 // pred_region
          %457 = dma.done [#allocation10], 2048
        $region84: #{tpu_custom_call.1} parent=63 // pred_fallthru
          _
        // Predicated region
        $region85: #{tpu_custom_call.1} parent=63 // pred_check
          %p458 = pneg %p255
        $region86: #{tpu_custom_call.1} parent=63 // pred_check_branch
          %460 = sbr.rel (%p458) target = $region88
        $region87: #{tpu_custom_call.1} parent=63 // pred_region
          %461 = dma.done [#allocation13], 2048
        $region88: #{tpu_custom_call.1} parent=63 // pred_fallthru
          _
        %s462 = sand.u32 %s53, 1
        %s463 = scalar_lea.sflag [#allocation4], %s462
        %s464 = sand.u32 %s53, 1
        %s465 = smul.addr %s464, 8
        %s466 = scalar_lea.vmem [#allocation3], %s465
        %p467 = pneg %p66
        %p468 = pneg %p63
        %p469 = pneg %p87
        %p470 = pneg %p84
        %p471 = pneg %p108
        %p472 = pneg %p105
        %p473 = pneg %p129
        %p474 = pneg %p126
        %p475 = pneg %p150
        %p476 = pneg %p147
        %p477 = pneg %p171
        %p478 = pneg %p168
        %p479 = pneg %p192
        %p480 = pneg %p189
        %p481 = pneg %p213
        %p482 = pneg %p210
        %p483 = pneg %p234
        %p484 = pneg %p231
        %p485 = pneg %p255
        %p486 = pneg %p252
        %p487 = pneg %p276
        %p488 = pneg %p273
        %p489 = pneg %p304
        %p490 = pneg %p301
        %s491 = sand.u32 %s291, 1
        %s492 = scalar_lea.sflag [#allocation5], %s491
        %s493 = sand.u32 %s291, 1
        %s494 = smul.addr %s493, 16
        %s495 = scalar_lea.vmem [#allocation14], %s494
        %s496 = smul.u32 2, %s36
        %s497 = smul.u32 2, %s36
        %499 = vst [vmem:[#allocation2] sm:$0xf] 0
        %500 = vst [vmem:[#allocation2 + $0x4] sm:$0xf] 0
        %v501 = vld [vmem:[%s437] sm:$0xf]
        %v502 = vld [vmem:[%s437 + $0x4] sm:$0xf]
        %503 = vst [vmem:[#allocation2 + $0x8] sm:$0xf] %v501
        %504 = vst [vmem:[#allocation2 + $0xc] sm:$0xf] %v502
        %v505 = vld [vmem:[#allocation2 + $0x4] sm:$0x8]
        %v506 = vld [vmem:[#allocation2 + $0x8] sm:$0xf]
        %v507 = vld [vmem:[#allocation2 + $0xc] sm:$0xf]
        %v511 = vunpack.c.l.b16 %v505
        %v512 = vunpack.c.l.b16 %v506
        %v513 = vunpack.c.l.b16 %v507
        %v514 = vpack.c.b16 %v512, %v511
        %v515 = vpack.c.b16 %v513, %v513
        %v518 = vunpack.c.l.b16 %v501
        %v519 = vunpack.c.l.b16 %v502
        %v520 = vpack.c.b16 %v519, %v518
        %v522 = vshrl.u32 %v520, 16
        %v524 = vrot.slane %v522, 4
        %v525 = vshll.u32 %v520, 16
        %v527 = vrot.slane %v525, 5
        %v528 = vor.u32 %v524, %v527
        %v529 = vld [vmem:[#allocation6] sm:$0xf]
        %v530 = vld [vmem:[#allocation6 + $0x4] sm:$0xf]
        %v531 = vld [vmem:[#allocation6 + $0x8] sm:$0xf]
        %v532 = vld [vmem:[#allocation6 + $0xc] sm:$0xf]
        %v533 = vld [vmem:[#allocation6 + $0x10] sm:$0xf]
        %v534 = vld [vmem:[#allocation6 + $0x14] sm:$0xf]
        %v535 = vld [vmem:[#allocation6 + $0x18] sm:$0xf]
        %v536 = vld [vmem:[#allocation6 + $0x1c] sm:$0xf]
        %v537 = vld [vmem:[#allocation6 + $0x20] sm:$0xf]
        %v538 = vld [vmem:[#allocation6 + $0x24] sm:$0xf]
        %v539 = vld [vmem:[#allocation6 + $0x28] sm:$0xf]
        %v540 = vld [vmem:[#allocation6 + $0x2c] sm:$0xf]
        %v541 = vld [vmem:[#allocation6 + $0x30] sm:$0xf]
        %v542 = vld [vmem:[#allocation6 + $0x34] sm:$0xf]
        %v543 = vld [vmem:[#allocation6 + $0x38] sm:$0xf]
        %v544 = vld [vmem:[#allocation6 + $0x3c] sm:$0xf]
        %v545 = vld [vmem:[#allocation6 + $0x40] sm:$0xf]
        %v546 = vld [vmem:[#allocation6 + $0x44] sm:$0xf]
        %v547 = vld [vmem:[#allocation6 + $0x48] sm:$0xf]
        %v548 = vld [vmem:[#allocation6 + $0x4c] sm:$0xf]
        %v549 = vld [vmem:[#allocation6 + $0x50] sm:$0xf]
        %v550 = vld [vmem:[#allocation6 + $0x54] sm:$0xf]
        %v551 = vld [vmem:[#allocation6 + $0x58] sm:$0xf]
        %v552 = vld [vmem:[#allocation6 + $0x5c] sm:$0xf]
        %v553 = vld [vmem:[#allocation6 + $0x60] sm:$0xf]
        %v554 = vld [vmem:[#allocation6 + $0x64] sm:$0xf]
        %v555 = vld [vmem:[#allocation6 + $0x68] sm:$0xf]
        %v556 = vld [vmem:[#allocation6 + $0x6c] sm:$0xf]
        %v557 = vld [vmem:[#allocation6 + $0x70] sm:$0xf]
        %v558 = vld [vmem:[#allocation6 + $0x74] sm:$0xf]
        %v559 = vld [vmem:[#allocation6 + $0x78] sm:$0xf]
        %v560 = vld [vmem:[#allocation6 + $0x7c] sm:$0xf]
        %v561 = vld [vmem:[%s2] sm:$0x1]
        %v563 = vlaneseq
        %v564 = vshrl.u32 %v563, 7
        %v565 = vsub.s32 0, %v564
        %v566 = vrot.slane %v561, %v565
        %vm568 = vsmask.f32 4352
        %v570 = vshrl.u32 %v514, 16
        %v572 = vrot.slane %v570, 3
        %v573 = vshll.u32 %v514, 16
        %v575 = vrot.slane %v573, 4
        %v576 = vor.u32 %v572, %v575
        %v578 = vshrl.u32 %v515, 16
        %v580 = vrot.slane %v578, 3
        %v581 = vshll.u32 %v515, 16
        %v583 = vrot.slane %v581, 4
        %v584 = vor.u32 %v580, %v583
        %v585 = vsel %vm568, %v576, %v584
        %v587 = vshrl.u32 %v528, 16
        %v589 = vrot.slane %v587, 3
        %v590 = vshll.u32 %v528, 16
        %v592 = vrot.slane %v590, 4
        %v593 = vor.u32 %v589, %v592
        %v594 = vsel %vm568, %v593, %v593
        %v629 = vunpack.c.l.b16 %v529
        %v630 = vunpack.c.l.b16 %v530
        %v631 = vunpack.c.l.b16 %v531
        %v632 = vunpack.c.l.b16 %v532
        %v633 = vunpack.c.l.b16 %v533
        %v634 = vunpack.c.l.b16 %v534
        %v635 = vunpack.c.l.b16 %v535
        %v636 = vunpack.c.l.b16 %v536
        %v637 = vunpack.c.l.b16 %v537
        %v638 = vunpack.c.l.b16 %v538
        %v639 = vunpack.c.l.b16 %v539
        %v640 = vunpack.c.l.b16 %v540
        %v641 = vunpack.c.l.b16 %v541
        %v642 = vunpack.c.l.b16 %v542
        %v643 = vunpack.c.l.b16 %v543
        %v644 = vunpack.c.l.b16 %v544
        %v645 = vunpack.c.l.b16 %v545
        %v646 = vunpack.c.l.b16 %v546
        %v647 = vunpack.c.l.b16 %v547
        %v648 = vunpack.c.l.b16 %v548
        %v649 = vunpack.c.l.b16 %v549
        %v650 = vunpack.c.l.b16 %v550
        %v651 = vunpack.c.l.b16 %v551
        %v652 = vunpack.c.l.b16 %v552
        %v653 = vunpack.c.l.b16 %v553
        %v654 = vunpack.c.l.b16 %v554
        %v655 = vunpack.c.l.b16 %v555
        %v656 = vunpack.c.l.b16 %v556
        %v657 = vunpack.c.l.b16 %v557
        %v658 = vunpack.c.l.b16 %v558
        %v659 = vunpack.c.l.b16 %v559
        %v660 = vunpack.c.l.b16 %v560
        %v661 = vpack.c.b16 %v630, %v629
        %v662 = vpack.c.b16 %v632, %v631
        %v663 = vpack.c.b16 %v634, %v633
        %v664 = vpack.c.b16 %v636, %v635
        %v665 = vpack.c.b16 %v638, %v637
        %v666 = vpack.c.b16 %v640, %v639
        %v667 = vpack.c.b16 %v642, %v641
        %v668 = vpack.c.b16 %v644, %v643
        %v669 = vpack.c.b16 %v646, %v645
        %v670 = vpack.c.b16 %v648, %v647
        %v671 = vpack.c.b16 %v650, %v649
        %v672 = vpack.c.b16 %v652, %v651
        %v673 = vpack.c.b16 %v654, %v653
        %v674 = vpack.c.b16 %v656, %v655
        %v675 = vpack.c.b16 %v658, %v657
        %v676 = vpack.c.b16 %v660, %v659
        %693 = vmatprep.subr.bf16.mxu0 0
        %694 = vmatpush1.bf16.msra.mxu0 %v668
        %695 = vmatprep.subr.bf16.mxu0 0
        %696 = vmatpush1.bf16.msra.mxu0 %v667
        %697 = vmatprep.subr.bf16.mxu0 0
        %698 = vmatpush1.bf16.msra.mxu0 %v666
        %699 = vmatprep.subr.bf16.mxu0 0
        %700 = vmatpush1.bf16.msra.mxu0 %v665
        %701 = vmatprep.subr.bf16.mxu0 0
        %702 = vmatpush1.bf16.msra.mxu0 %v664
        %703 = vmatprep.subr.bf16.mxu0 0
        %704 = vmatpush1.bf16.msra.mxu0 %v663
        %705 = vmatprep.subr.bf16.mxu0 0
        %706 = vmatpush1.bf16.msra.mxu0 %v662
        %707 = vmatprep.subr.bf16.mxu0 0
        %708 = vmatpush1.bf16.msra.mxu0 %v661
        %709 = vmatprep.subr.bf16.mxu0 0
        %710 = vmatpush2.bf16.msra.mxu0 %v676
        %711 = vmatprep.subr.bf16.mxu0 0
        %712 = vmatpush2.bf16.msra.mxu0 %v675
        %713 = vmatprep.subr.bf16.mxu0 0
        %714 = vmatpush2.bf16.msra.mxu0 %v674
        %715 = vmatprep.subr.bf16.mxu0 0
        %716 = vmatpush2.bf16.msra.mxu0 %v673
        %717 = vmatprep.subr.bf16.mxu0 0
        %718 = vmatpush2.bf16.msra.mxu0 %v672
        %719 = vmatprep.subr.bf16.mxu0 0
        %720 = vmatpush2.bf16.msra.mxu0 %v671
        %721 = vmatprep.subr.bf16.mxu0 0
        %722 = vmatpush2.bf16.msra.mxu0 %v670
        %723 = vmatprep.subr.bf16.mxu0 0
        %724 = vmatpush2.bf16.msra.mxu0 %v669
        %725 = vmatprep.mubr.bf16.mxu0 %v594
        %726 = vmatmul.mubr.bf16.gmra.mxu0 %v585
        %v727 = vpop.f32.mrf.mxu0
        %v728 = vadd.f32 %v566, %v727
        %v729 = vpop.f32.mrf.mxu0
        %v730 = vpop.f32.mrf.mxu0
        %v731 = vadd.f32 %v566, %v730
        %v732 = vpop.f32.mrf.mxu0
        %733 = vdwg.mxu0
        %v734 = vmax.f32 %v728, 0.0
        %v735 = vmax.f32 %v731, 0.0
        %v736 = vpack.c.bf16 %v735, %v734
        %v738 = vunpack.c.l.b16 %v736
        %v739 = vunpack.c.h.b16 %v736
        %v740 = vpack.c.b16 %v738, %v738
        %v741 = vpack.c.b16 %v739, %v739
        %744 = vst [vmem:[#allocation2 + $0x8] sm:$0xf] %v740
        %745 = vst [vmem:[#allocation2 + $0xc] sm:$0xf] %v741
        %v746 = vld [vmem:[#allocation2 + $0x4] sm:$0x8]
        %v747 = vld [vmem:[#allocation2 + $0x8] sm:$0xf]
        %v748 = vld [vmem:[#allocation2 + $0xc] sm:$0xf]
        %v752 = vunpack.c.l.b16 %v746
        %v753 = vunpack.c.l.b16 %v747
        %v754 = vunpack.c.l.b16 %v748
        %v755 = vpack.c.b16 %v753, %v752
        %v756 = vpack.c.b16 %v754, %v754
        %v758 = vshrl.u32 %v736, 16
        %v760 = vrot.slane %v758, 4
        %v761 = vshll.u32 %v736, 16
        %v763 = vrot.slane %v761, 5
        %v764 = vor.u32 %v760, %v763
        %v765 = vld [vmem:[#allocation8] sm:$0xf]
        %v766 = vld [vmem:[#allocation8 + $0x4] sm:$0xf]
        %v767 = vld [vmem:[#allocation8 + $0x8] sm:$0xf]
        %v768 = vld [vmem:[#allocation8 + $0xc] sm:$0xf]
        %v769 = vld [vmem:[#allocation8 + $0x10] sm:$0xf]
        %v770 = vld [vmem:[#allocation8 + $0x14] sm:$0xf]
        %v771 = vld [vmem:[#allocation8 + $0x18] sm:$0xf]
        %v772 = vld [vmem:[#allocation8 + $0x1c] sm:$0xf]
        %v773 = vld [vmem:[#allocation8 + $0x20] sm:$0xf]
        %v774 = vld [vmem:[#allocation8 + $0x24] sm:$0xf]
        %v775 = vld [vmem:[#allocation8 + $0x28] sm:$0xf]
        %v776 = vld [vmem:[#allocation8 + $0x2c] sm:$0xf]
        %v777 = vld [vmem:[#allocation8 + $0x30] sm:$0xf]
        %v778 = vld [vmem:[#allocation8 + $0x34] sm:$0xf]
        %v779 = vld [vmem:[#allocation8 + $0x38] sm:$0xf]
        %v780 = vld [vmem:[#allocation8 + $0x3c] sm:$0xf]
        %v781 = vld [vmem:[#allocation8 + $0x40] sm:$0xf]
        %v782 = vld [vmem:[#allocation8 + $0x44] sm:$0xf]
        %v783 = vld [vmem:[#allocation8 + $0x48] sm:$0xf]
        %v784 = vld [vmem:[#allocation8 + $0x4c] sm:$0xf]
        %v785 = vld [vmem:[#allocation8 + $0x50] sm:$0xf]
        %v786 = vld [vmem:[#allocation8 + $0x54] sm:$0xf]
        %v787 = vld [vmem:[#allocation8 + $0x58] sm:$0xf]
        %v788 = vld [vmem:[#allocation8 + $0x5c] sm:$0xf]
        %v789 = vld [vmem:[#allocation8 + $0x60] sm:$0xf]
        %v790 = vld [vmem:[#allocation8 + $0x64] sm:$0xf]
        %v791 = vld [vmem:[#allocation8 + $0x68] sm:$0xf]
        %v792 = vld [vmem:[#allocation8 + $0x6c] sm:$0xf]
        %v793 = vld [vmem:[#allocation8 + $0x70] sm:$0xf]
        %v794 = vld [vmem:[#allocation8 + $0x74] sm:$0xf]
        %v795 = vld [vmem:[#allocation8 + $0x78] sm:$0xf]
        %v796 = vld [vmem:[#allocation8 + $0x7c] sm:$0xf]
        %v797 = vld [vmem:[%s4] sm:$0x1]
        %v799 = vlaneseq
        %v800 = vshrl.u32 %v799, 7
        %v801 = vsub.s32 0, %v800
        %v802 = vrot.slane %v797, %v801
        %v805 = vshrl.u32 %v755, 16
        %v807 = vrot.slane %v805, 3
        %v808 = vshll.u32 %v755, 16
        %v810 = vrot.slane %v808, 4
        %v811 = vor.u32 %v807, %v810
        %v813 = vshrl.u32 %v756, 16
        %v815 = vrot.slane %v813, 3
        %v816 = vshll.u32 %v756, 16
        %v818 = vrot.slane %v816, 4
        %v819 = vor.u32 %v815, %v818
        %v820 = vsel %vm568, %v811, %v819
        %v822 = vshrl.u32 %v764, 16
        %v824 = vrot.slane %v822, 3
        %v825 = vshll.u32 %v764, 16
        %v827 = vrot.slane %v825, 4
        %v828 = vor.u32 %v824, %v827
        %v829 = vsel %vm568, %v828, %v828
        %v864 = vunpack.c.l.b16 %v765
        %v865 = vunpack.c.l.b16 %v766
        %v866 = vunpack.c.l.b16 %v767
        %v867 = vunpack.c.l.b16 %v768
        %v868 = vunpack.c.l.b16 %v769
        %v869 = vunpack.c.l.b16 %v770
        %v870 = vunpack.c.l.b16 %v771
        %v871 = vunpack.c.l.b16 %v772
        %v872 = vunpack.c.l.b16 %v773
        %v873 = vunpack.c.l.b16 %v774
        %v874 = vunpack.c.l.b16 %v775
        %v875 = vunpack.c.l.b16 %v776
        %v876 = vunpack.c.l.b16 %v777
        %v877 = vunpack.c.l.b16 %v778
        %v878 = vunpack.c.l.b16 %v779
        %v879 = vunpack.c.l.b16 %v780
        %v880 = vunpack.c.l.b16 %v781
        %v881 = vunpack.c.l.b16 %v782
        %v882 = vunpack.c.l.b16 %v783
        %v883 = vunpack.c.l.b16 %v784
        %v884 = vunpack.c.l.b16 %v785
        %v885 = vunpack.c.l.b16 %v786
        %v886 = vunpack.c.l.b16 %v787
        %v887 = vunpack.c.l.b16 %v788
        %v888 = vunpack.c.l.b16 %v789
        %v889 = vunpack.c.l.b16 %v790
        %v890 = vunpack.c.l.b16 %v791
        %v891 = vunpack.c.l.b16 %v792
        %v892 = vunpack.c.l.b16 %v793
        %v893 = vunpack.c.l.b16 %v794
        %v894 = vunpack.c.l.b16 %v795
        %v895 = vunpack.c.l.b16 %v796
        %v896 = vpack.c.b16 %v865, %v864
        %v897 = vpack.c.b16 %v867, %v866
        %v898 = vpack.c.b16 %v869, %v868
        %v899 = vpack.c.b16 %v871, %v870
        %v900 = vpack.c.b16 %v873, %v872
        %v901 = vpack.c.b16 %v875, %v874
        %v902 = vpack.c.b16 %v877, %v876
        %v903 = vpack.c.b16 %v879, %v878
        %v904 = vpack.c.b16 %v881, %v880
        %v905 = vpack.c.b16 %v883, %v882
        %v906 = vpack.c.b16 %v885, %v884
        %v907 = vpack.c.b16 %v887, %v886
        %v908 = vpack.c.b16 %v889, %v888
        %v909 = vpack.c.b16 %v891, %v890
        %v910 = vpack.c.b16 %v893, %v892
        %v911 = vpack.c.b16 %v895, %v894
        %928 = vmatprep.subr.bf16.mxu0 0
        %929 = vmatpush1.bf16.msra.mxu0 %v903
        %930 = vmatprep.subr.bf16.mxu0 0
        %931 = vmatpush1.bf16.msra.mxu0 %v902
        %932 = vmatprep.subr.bf16.mxu0 0
        %933 = vmatpush1.bf16.msra.mxu0 %v901
        %934 = vmatprep.subr.bf16.mxu0 0
        %935 = vmatpush1.bf16.msra.mxu0 %v900
        %936 = vmatprep.subr.bf16.mxu0 0
        %937 = vmatpush1.bf16.msra.mxu0 %v899
        %938 = vmatprep.subr.bf16.mxu0 0
        %939 = vmatpush1.bf16.msra.mxu0 %v898
        %940 = vmatprep.subr.bf16.mxu0 0
        %941 = vmatpush1.bf16.msra.mxu0 %v897
        %942 = vmatprep.subr.bf16.mxu0 0
        %943 = vmatpush1.bf16.msra.mxu0 %v896
        %944 = vmatprep.subr.bf16.mxu0 0
        %945 = vmatpush2.bf16.msra.mxu0 %v911
        %946 = vmatprep.subr.bf16.mxu0 0
        %947 = vmatpush2.bf16.msra.mxu0 %v910
        %948 = vmatprep.subr.bf16.mxu0 0
        %949 = vmatpush2.bf16.msra.mxu0 %v909
        %950 = vmatprep.subr.bf16.mxu0 0
        %951 = vmatpush2.bf16.msra.mxu0 %v908
        %952 = vmatprep.subr.bf16.mxu0 0
        %953 = vmatpush2.bf16.msra.mxu0 %v907
        %954 = vmatprep.subr.bf16.mxu0 0
        %955 = vmatpush2.bf16.msra.mxu0 %v906
        %956 = vmatprep.subr.bf16.mxu0 0
        %957 = vmatpush2.bf16.msra.mxu0 %v905
        %958 = vmatprep.subr.bf16.mxu0 0
        %959 = vmatpush2.bf16.msra.mxu0 %v904
        %960 = vmatprep.mubr.bf16.mxu0 %v829
        %961 = vmatmul.mubr.bf16.gmra.mxu0 %v820
        %v962 = vpop.f32.mrf.mxu0
        %v963 = vadd.f32 %v802, %v962
        %v964 = vpop.f32.mrf.mxu0
        %v965 = vpop.f32.mrf.mxu0
        %v966 = vadd.f32 %v802, %v965
        %v967 = vpop.f32.mrf.mxu0
        %968 = vdwg.mxu0
        %v969 = vmax.f32 %v963, 0.0
        %v970 = vmax.f32 %v966, 0.0
        %v971 = vld [vmem:[#allocation9] sm:$0xf]
        %v972 = vld [vmem:[#allocation9 + $0x4] sm:$0xf]
        %v973 = vld [vmem:[#allocation9 + $0x8] sm:$0xf]
        %v974 = vld [vmem:[#allocation9 + $0xc] sm:$0xf]
        %v975 = vld [vmem:[#allocation9 + $0x10] sm:$0xf]
        %v976 = vld [vmem:[#allocation9 + $0x14] sm:$0xf]
        %v977 = vld [vmem:[#allocation9 + $0x18] sm:$0xf]
        %v978 = vld [vmem:[#allocation9 + $0x1c] sm:$0xf]
        %v979 = vld [vmem:[#allocation9 + $0x20] sm:$0xf]
        %v980 = vld [vmem:[#allocation9 + $0x24] sm:$0xf]
        %v981 = vld [vmem:[#allocation9 + $0x28] sm:$0xf]
        %v982 = vld [vmem:[#allocation9 + $0x2c] sm:$0xf]
        %v983 = vld [vmem:[#allocation9 + $0x30] sm:$0xf]
        %v984 = vld [vmem:[#allocation9 + $0x34] sm:$0xf]
        %v985 = vld [vmem:[#allocation9 + $0x38] sm:$0xf]
        %v986 = vld [vmem:[#allocation9 + $0x3c] sm:$0xf]
        %v987 = vld [vmem:[%s6] sm:$0x1]
        %v989 = vlaneseq
        %v990 = vshrl.u32 %v989, 7
        %v991 = vsub.s32 0, %v990
        %v992 = vrot.slane %v987, %v991
        %v1011 = vunpack.c.l.b16 %v971
        %v1012 = vunpack.c.l.b16 %v972
        %v1013 = vunpack.c.l.b16 %v973
        %v1014 = vunpack.c.l.b16 %v974
        %v1015 = vunpack.c.l.b16 %v975
        %v1016 = vunpack.c.l.b16 %v976
        %v1017 = vunpack.c.l.b16 %v977
        %v1018 = vunpack.c.l.b16 %v978
        %v1019 = vunpack.c.l.b16 %v979
        %v1020 = vunpack.c.l.b16 %v980
        %v1021 = vunpack.c.l.b16 %v981
        %v1022 = vunpack.c.l.b16 %v982
        %v1023 = vunpack.c.l.b16 %v983
        %v1024 = vunpack.c.l.b16 %v984
        %v1025 = vunpack.c.l.b16 %v985
        %v1026 = vunpack.c.l.b16 %v986
        %v1027 = vpack.c.b16 %v1012, %v1011
        %v1028 = vpack.c.b16 %v1014, %v1013
        %v1029 = vpack.c.b16 %v1016, %v1015
        %v1030 = vpack.c.b16 %v1018, %v1017
        %v1031 = vpack.c.b16 %v1020, %v1019
        %v1032 = vpack.c.b16 %v1022, %v1021
        %v1033 = vpack.c.b16 %v1024, %v1023
        %v1034 = vpack.c.b16 %v1026, %v1025
        %1043 = vmatprep.subr.bf16.mxu0 0
        %1044 = vmatpush1.bf16.msra.mxu0 %v1034
        %1045 = vmatprep.subr.bf16.mxu0 0
        %1046 = vmatpush1.bf16.msra.mxu0 %v1033
        %1047 = vmatprep.subr.bf16.mxu0 0
        %1048 = vmatpush1.bf16.msra.mxu0 %v1032
        %1049 = vmatprep.subr.bf16.mxu0 0
        %1050 = vmatpush1.bf16.msra.mxu0 %v1031
        %1051 = vmatprep.subr.bf16.mxu0 0
        %1052 = vmatpush1.bf16.msra.mxu0 %v1030
        %1053 = vmatprep.subr.bf16.mxu0 0
        %1054 = vmatpush1.bf16.msra.mxu0 %v1029
        %1055 = vmatprep.subr.bf16.mxu0 0
        %1056 = vmatpush1.bf16.msra.mxu0 %v1028
        %1057 = vmatprep.subr.bf16.mxu0 0
        %1058 = vmatpush1.bf16.msra.mxu0 %v1027
        %1059 = vmatprep.subr.bf16.mxu0 0
        %1060 = vmatpush2.bf16.msra.mxu0 0
        %1061 = vmatprep.subr.bf16.mxu0 0
        %1062 = vmatpush2.bf16.msra.mxu0 0
        %1063 = vmatprep.subr.bf16.mxu0 0
        %1064 = vmatpush2.bf16.msra.mxu0 0
        %1065 = vmatprep.subr.bf16.mxu0 0
        %1066 = vmatpush2.bf16.msra.mxu0 0
        %1067 = vmatprep.subr.bf16.mxu0 0
        %1068 = vmatpush2.bf16.msra.mxu0 0
        %1069 = vmatprep.subr.bf16.mxu0 0
        %1070 = vmatpush2.bf16.msra.mxu0 0
        %1071 = vmatprep.subr.bf16.mxu0 0
        %1072 = vmatpush2.bf16.msra.mxu0 0
        %1073 = vmatprep.subr.bf16.mxu0 0
        %1074 = vmatpush2.bf16.msra.mxu0 0
        %1075 = vmatprep.mubr.bf16.mxu0 0
        %1076 = vmatmul.mubr.bf16.gmra.mxu0 %v520
        %v1077 = vpop.f32.mrf.mxu0
        %v1078 = vadd.f32 %v992, %v1077
        %v1079 = vpop.f32.mrf.mxu0
        %v1080 = vpop.f32.mrf.mxu0
        %v1081 = vadd.f32 %v992, %v1080
        %v1082 = vpop.f32.mrf.mxu0
        %1083 = vdwg.mxu0
        %v1084 = vadd.f32 %v969, %v1078
        %v1085 = vadd.f32 %v970, %v1081
        %v1086 = vmax.f32 %v1084, 0.0
        %v1087 = vmax.f32 %v1085, 0.0
        %v1088 = vpack.c.bf16 %v1087, %v1086
        %v1090 = vunpack.c.l.b16 %v1088
        %v1091 = vunpack.c.h.b16 %v1088
        %v1092 = vpack.c.b16 %v1090, %v1090
        %v1093 = vpack.c.b16 %v1091, %v1091
        %1096 = vst [vmem:[#allocation2 + $0x8] sm:$0xf] %v1092
        %1097 = vst [vmem:[#allocation2 + $0xc] sm:$0xf] %v1093
        %v1098 = vld [vmem:[#allocation2 + $0x4] sm:$0x8]
        %v1099 = vld [vmem:[#allocation2 + $0x8] sm:$0xf]
        %v1100 = vld [vmem:[#allocation2 + $0xc] sm:$0x7]
        %v1104 = vunpack.c.l.b16 %v1098
        %v1105 = vunpack.c.l.b16 %v1099
        %v1106 = vunpack.c.l.b16 %v1100
        %v1107 = vpack.c.b16 %v1105, %v1104
        %v1108 = vpack.c.b16 %v1106, %v1106
        %v1109 = vrot.slane %v1088, 5
        %v1110 = vld [vmem:[#allocation11] sm:$0xf]
        %v1111 = vld [vmem:[#allocation11 + $0x4] sm:$0xf]
        %v1112 = vld [vmem:[#allocation11 + $0x8] sm:$0xf]
        %v1113 = vld [vmem:[#allocation11 + $0xc] sm:$0xf]
        %v1114 = vld [vmem:[#allocation11 + $0x10] sm:$0xf]
        %v1115 = vld [vmem:[#allocation11 + $0x14] sm:$0xf]
        %v1116 = vld [vmem:[#allocation11 + $0x18] sm:$0xf]
        %v1117 = vld [vmem:[#allocation11 + $0x1c] sm:$0xf]
        %v1118 = vld [vmem:[#allocation11 + $0x20] sm:$0xf]
        %v1119 = vld [vmem:[#allocation11 + $0x24] sm:$0xf]
        %v1120 = vld [vmem:[#allocation11 + $0x28] sm:$0xf]
        %v1121 = vld [vmem:[#allocation11 + $0x2c] sm:$0xf]
        %v1122 = vld [vmem:[#allocation11 + $0x30] sm:$0xf]
        %v1123 = vld [vmem:[#allocation11 + $0x34] sm:$0xf]
        %v1124 = vld [vmem:[#allocation11 + $0x38] sm:$0xf]
        %v1125 = vld [vmem:[#allocation11 + $0x3c] sm:$0xf]
        %v1126 = vld [vmem:[#allocation11 + $0x40] sm:$0xf]
        %v1127 = vld [vmem:[#allocation11 + $0x44] sm:$0xf]
        %v1128 = vld [vmem:[#allocation11 + $0x48] sm:$0xf]
        %v1129 = vld [vmem:[#allocation11 + $0x4c] sm:$0xf]
        %v1130 = vld [vmem:[#allocation11 + $0x50] sm:$0xf]
        %v1131 = vld [vmem:[#allocation11 + $0x54] sm:$0xf]
        %v1132 = vld [vmem:[#allocation11 + $0x58] sm:$0xf]
        %v1133 = vld [vmem:[#allocation11 + $0x5c] sm:$0xf]
        %v1134 = vld [vmem:[#allocation11 + $0x60] sm:$0xf]
        %v1135 = vld [vmem:[#allocation11 + $0x64] sm:$0xf]
        %v1136 = vld [vmem:[#allocation11 + $0x68] sm:$0xf]
        %v1137 = vld [vmem:[#allocation11 + $0x6c] sm:$0xf]
        %v1138 = vld [vmem:[#allocation11 + $0x70] sm:$0xf]
        %v1139 = vld [vmem:[#allocation11 + $0x74] sm:$0xf]
        %v1140 = vld [vmem:[#allocation11 + $0x78] sm:$0xf]
        %v1141 = vld [vmem:[#allocation11 + $0x7c] sm:$0xf]
        %v1142 = vld [vmem:[%s8] sm:$0x1]
        %v1144 = vlaneseq
        %v1145 = vshrl.u32 %v1144, 7
        %v1146 = vsub.s32 0, %v1145
        %v1147 = vrot.slane %v1142, %v1146
        %vm1149 = vcmask 1044480
        %v1150 = vrot.slane %v1107, 3
        %v1151 = vrot.slane %v1108, 3
        %v1152 = vsel %vm1149, %v1150, %v1151
        %v1153 = vrot.slane %v1109, 3
        %v1154 = vsel %vm1149, %v1153, %v1153
        %v1189 = vunpack.c.l.b16 %v1110
        %v1190 = vunpack.c.l.b16 %v1111
        %v1191 = vunpack.c.l.b16 %v1112
        %v1192 = vunpack.c.l.b16 %v1113
        %v1193 = vunpack.c.l.b16 %v1114
        %v1194 = vunpack.c.l.b16 %v1115
        %v1195 = vunpack.c.l.b16 %v1116
        %v1196 = vunpack.c.l.b16 %v1117
        %v1197 = vunpack.c.l.b16 %v1118
        %v1198 = vunpack.c.l.b16 %v1119
        %v1199 = vunpack.c.l.b16 %v1120
        %v1200 = vunpack.c.l.b16 %v1121
        %v1201 = vunpack.c.l.b16 %v1122
        %v1202 = vunpack.c.l.b16 %v1123
        %v1203 = vunpack.c.l.b16 %v1124
        %v1204 = vunpack.c.l.b16 %v1125
        %v1205 = vunpack.c.l.b16 %v1126
        %v1206 = vunpack.c.l.b16 %v1127
        %v1207 = vunpack.c.l.b16 %v1128
        %v1208 = vunpack.c.l.b16 %v1129
        %v1209 = vunpack.c.l.b16 %v1130
        %v1210 = vunpack.c.l.b16 %v1131
        %v1211 = vunpack.c.l.b16 %v1132
        %v1212 = vunpack.c.l.b16 %v1133
        %v1213 = vunpack.c.l.b16 %v1134
        %v1214 = vunpack.c.l.b16 %v1135
        %v1215 = vunpack.c.l.b16 %v1136
        %v1216 = vunpack.c.l.b16 %v1137
        %v1217 = vunpack.c.l.b16 %v1138
        %v1218 = vunpack.c.l.b16 %v1139
        %v1219 = vunpack.c.l.b16 %v1140
        %v1220 = vunpack.c.l.b16 %v1141
        %v1221 = vpack.c.b16 %v1190, %v1189
        %v1222 = vpack.c.b16 %v1192, %v1191
        %v1223 = vpack.c.b16 %v1194, %v1193
        %v1224 = vpack.c.b16 %v1196, %v1195
        %v1225 = vpack.c.b16 %v1198, %v1197
        %v1226 = vpack.c.b16 %v1200, %v1199
        %v1227 = vpack.c.b16 %v1202, %v1201
        %v1228 = vpack.c.b16 %v1204, %v1203
        %v1229 = vpack.c.b16 %v1206, %v1205
        %v1230 = vpack.c.b16 %v1208, %v1207
        %v1231 = vpack.c.b16 %v1210, %v1209
        %v1232 = vpack.c.b16 %v1212, %v1211
        %v1233 = vpack.c.b16 %v1214, %v1213
        %v1234 = vpack.c.b16 %v1216, %v1215
        %v1235 = vpack.c.b16 %v1218, %v1217
        %v1236 = vpack.c.b16 %v1220, %v1219
        %1253 = vmatprep.subr.bf16.mxu0 0
        %1254 = vmatpush1.bf16.msra.mxu0 %v1228
        %1255 = vmatprep.subr.bf16.mxu0 0
        %1256 = vmatpush1.bf16.msra.mxu0 %v1227
        %1257 = vmatprep.subr.bf16.mxu0 0
        %1258 = vmatpush1.bf16.msra.mxu0 %v1226
        %1259 = vmatprep.subr.bf16.mxu0 0
        %1260 = vmatpush1.bf16.msra.mxu0 %v1225
        %1261 = vmatprep.subr.bf16.mxu0 0
        %1262 = vmatpush1.bf16.msra.mxu0 %v1224
        %1263 = vmatprep.subr.bf16.mxu0 0
        %1264 = vmatpush1.bf16.msra.mxu0 %v1223
        %1265 = vmatprep.subr.bf16.mxu0 0
        %1266 = vmatpush1.bf16.msra.mxu0 %v1222
        %1267 = vmatprep.subr.bf16.mxu0 0
        %1268 = vmatpush1.bf16.msra.mxu0 %v1221
        %1269 = vmatprep.subr.bf16.mxu0 0
        %1270 = vmatpush2.bf16.msra.mxu0 %v1236
        %1271 = vmatprep.subr.bf16.mxu0 0
        %1272 = vmatpush2.bf16.msra.mxu0 %v1235
        %1273 = vmatprep.subr.bf16.mxu0 0
        %1274 = vmatpush2.bf16.msra.mxu0 %v1234
        %1275 = vmatprep.subr.bf16.mxu0 0
        %1276 = vmatpush2.bf16.msra.mxu0 %v1233
        %1277 = vmatprep.subr.bf16.mxu0 0
        %1278 = vmatpush2.bf16.msra.mxu0 %v1232
        %1279 = vmatprep.subr.bf16.mxu0 0
        %1280 = vmatpush2.bf16.msra.mxu0 %v1231
        %1281 = vmatprep.subr.bf16.mxu0 0
        %1282 = vmatpush2.bf16.msra.mxu0 %v1230
        %1283 = vmatprep.subr.bf16.mxu0 0
        %1284 = vmatpush2.bf16.msra.mxu0 %v1229
        %1285 = vmatprep.mubr.bf16.mxu0 %v1154
        %1286 = vmatmul.mubr.bf16.gmra.mxu0 %v1152
        %v1287 = vpop.f32.mrf.mxu0
        %v1288 = vadd.f32 %v1147, %v1287
        %v1289 = vpop.f32.mrf.mxu0
        %v1290 = vpop.f32.mrf.mxu0
        %v1291 = vadd.f32 %v1147, %v1290
        %v1292 = vpop.f32.mrf.mxu0
        %1293 = vdwg.mxu0
        %v1294 = vmax.f32 %v1288, 0.0
        %v1295 = vmax.f32 %v1291, 0.0
        %v1296 = vpack.c.bf16 %v1295, %v1294
        %v1298 = vunpack.c.l.b16 %v1296
        %v1299 = vunpack.c.h.b16 %v1296
        %v1300 = vpack.c.b16 %v1298, %v1298
        %v1301 = vpack.c.b16 %v1299, %v1299
        %1304 = vst [vmem:[#allocation2 + $0x8] sm:$0xf] %v1300
        %1305 = vst [vmem:[#allocation2 + $0xc] sm:$0xf] %v1301
        %v1306 = vld [vmem:[#allocation2 + $0x4] sm:$0x8]
        %v1307 = vld [vmem:[#allocation2 + $0x8] sm:$0xf]
        %v1308 = vld [vmem:[#allocation2 + $0xc] sm:$0x7]
        %v1312 = vunpack.c.l.b16 %v1306
        %v1313 = vunpack.c.l.b16 %v1307
        %v1314 = vunpack.c.l.b16 %v1308
        %v1315 = vpack.c.b16 %v1313, %v1312
        %v1316 = vpack.c.b16 %v1314, %v1314
        %v1317 = vrot.slane %v1296, 5
        %v1318 = vld [vmem:[#allocation12] sm:$0xf]
        %v1319 = vld [vmem:[#allocation12 + $0x4] sm:$0xf]
        %v1320 = vld [vmem:[#allocation12 + $0x8] sm:$0xf]
        %v1321 = vld [vmem:[#allocation12 + $0xc] sm:$0xf]
        %v1322 = vld [vmem:[#allocation12 + $0x10] sm:$0xf]
        %v1323 = vld [vmem:[#allocation12 + $0x14] sm:$0xf]
        %v1324 = vld [vmem:[#allocation12 + $0x18] sm:$0xf]
        %v1325 = vld [vmem:[#allocation12 + $0x1c] sm:$0xf]
        %v1326 = vld [vmem:[#allocation12 + $0x20] sm:$0xf]
        %v1327 = vld [vmem:[#allocation12 + $0x24] sm:$0xf]
        %v1328 = vld [vmem:[#allocation12 + $0x28] sm:$0xf]
        %v1329 = vld [vmem:[#allocation12 + $0x2c] sm:$0xf]
        %v1330 = vld [vmem:[#allocation12 + $0x30] sm:$0xf]
        %v1331 = vld [vmem:[#allocation12 + $0x34] sm:$0xf]
        %v1332 = vld [vmem:[#allocation12 + $0x38] sm:$0xf]
        %v1333 = vld [vmem:[#allocation12 + $0x3c] sm:$0xf]
        %v1334 = vld [vmem:[#allocation12 + $0x40] sm:$0xf]
        %v1335 = vld [vmem:[#allocation12 + $0x44] sm:$0xf]
        %v1336 = vld [vmem:[#allocation12 + $0x48] sm:$0xf]
        %v1337 = vld [vmem:[#allocation12 + $0x4c] sm:$0xf]
        %v1338 = vld [vmem:[#allocation12 + $0x50] sm:$0xf]
        %v1339 = vld [vmem:[#allocation12 + $0x54] sm:$0xf]
        %v1340 = vld [vmem:[#allocation12 + $0x58] sm:$0xf]
        %v1341 = vld [vmem:[#allocation12 + $0x5c] sm:$0xf]
        %v1342 = vld [vmem:[#allocation12 + $0x60] sm:$0xf]
        %v1343 = vld [vmem:[#allocation12 + $0x64] sm:$0xf]
        %v1344 = vld [vmem:[#allocation12 + $0x68] sm:$0xf]
        %v1345 = vld [vmem:[#allocation12 + $0x6c] sm:$0xf]
        %v1346 = vld [vmem:[#allocation12 + $0x70] sm:$0xf]
        %v1347 = vld [vmem:[#allocation12 + $0x74] sm:$0xf]
        %v1348 = vld [vmem:[#allocation12 + $0x78] sm:$0xf]
        %v1349 = vld [vmem:[#allocation12 + $0x7c] sm:$0xf]
        %v1350 = vld [vmem:[%s10] sm:$0x1]
        %v1352 = vlaneseq
        %v1353 = vshrl.u32 %v1352, 7
        %v1354 = vsub.s32 0, %v1353
        %v1355 = vrot.slane %v1350, %v1354
        %v1357 = vrot.slane %v1315, 3
        %v1358 = vrot.slane %v1316, 3
        %v1359 = vsel %vm1149, %v1357, %v1358
        %v1360 = vrot.slane %v1317, 3
        %v1361 = vsel %vm1149, %v1360, %v1360
        %v1396 = vunpack.c.l.b16 %v1318
        %v1397 = vunpack.c.l.b16 %v1319
        %v1398 = vunpack.c.l.b16 %v1320
        %v1399 = vunpack.c.l.b16 %v1321
        %v1400 = vunpack.c.l.b16 %v1322
        %v1401 = vunpack.c.l.b16 %v1323
        %v1402 = vunpack.c.l.b16 %v1324
        %v1403 = vunpack.c.l.b16 %v1325
        %v1404 = vunpack.c.l.b16 %v1326
        %v1405 = vunpack.c.l.b16 %v1327
        %v1406 = vunpack.c.l.b16 %v1328
        %v1407 = vunpack.c.l.b16 %v1329
        %v1408 = vunpack.c.l.b16 %v1330
        %v1409 = vunpack.c.l.b16 %v1331
        %v1410 = vunpack.c.l.b16 %v1332
        %v1411 = vunpack.c.l.b16 %v1333
        %v1412 = vunpack.c.l.b16 %v1334
        %v1413 = vunpack.c.l.b16 %v1335
        %v1414 = vunpack.c.l.b16 %v1336
        %v1415 = vunpack.c.l.b16 %v1337
        %v1416 = vunpack.c.l.b16 %v1338
        %v1417 = vunpack.c.l.b16 %v1339
        %v1418 = vunpack.c.l.b16 %v1340
        %v1419 = vunpack.c.l.b16 %v1341
        %v1420 = vunpack.c.l.b16 %v1342
        %v1421 = vunpack.c.l.b16 %v1343
        %v1422 = vunpack.c.l.b16 %v1344
        %v1423 = vunpack.c.l.b16 %v1345
        %v1424 = vunpack.c.l.b16 %v1346
        %v1425 = vunpack.c.l.b16 %v1347
        %v1426 = vunpack.c.l.b16 %v1348
        %v1427 = vunpack.c.l.b16 %v1349
        %v1428 = vpack.c.b16 %v1397, %v1396
        %v1429 = vpack.c.b16 %v1399, %v1398
        %v1430 = vpack.c.b16 %v1401, %v1400
        %v1431 = vpack.c.b16 %v1403, %v1402
        %v1432 = vpack.c.b16 %v1405, %v1404
        %v1433 = vpack.c.b16 %v1407, %v1406
        %v1434 = vpack.c.b16 %v1409, %v1408
        %v1435 = vpack.c.b16 %v1411, %v1410
        %v1436 = vpack.c.b16 %v1413, %v1412
        %v1437 = vpack.c.b16 %v1415, %v1414
        %v1438 = vpack.c.b16 %v1417, %v1416
        %v1439 = vpack.c.b16 %v1419, %v1418
        %v1440 = vpack.c.b16 %v1421, %v1420
        %v1441 = vpack.c.b16 %v1423, %v1422
        %v1442 = vpack.c.b16 %v1425, %v1424
        %v1443 = vpack.c.b16 %v1427, %v1426
        %1460 = vmatprep.subr.bf16.mxu0 0
        %1461 = vmatpush1.bf16.msra.mxu0 %v1435
        %1462 = vmatprep.subr.bf16.mxu0 0
        %1463 = vmatpush1.bf16.msra.mxu0 %v1434
        %1464 = vmatprep.subr.bf16.mxu0 0
        %1465 = vmatpush1.bf16.msra.mxu0 %v1433
        %1466 = vmatprep.subr.bf16.mxu0 0
        %1467 = vmatpush1.bf16.msra.mxu0 %v1432
        %1468 = vmatprep.subr.bf16.mxu0 0
        %1469 = vmatpush1.bf16.msra.mxu0 %v1431
        %1470 = vmatprep.subr.bf16.mxu0 0
        %1471 = vmatpush1.bf16.msra.mxu0 %v1430
        %1472 = vmatprep.subr.bf16.mxu0 0
        %1473 = vmatpush1.bf16.msra.mxu0 %v1429
        %1474 = vmatprep.subr.bf16.mxu0 0
        %1475 = vmatpush1.bf16.msra.mxu0 %v1428
        %1476 = vmatprep.subr.bf16.mxu0 0
        %1477 = vmatpush2.bf16.msra.mxu0 %v1443
        %1478 = vmatprep.subr.bf16.mxu0 0
        %1479 = vmatpush2.bf16.msra.mxu0 %v1442
        %1480 = vmatprep.subr.bf16.mxu0 0
        %1481 = vmatpush2.bf16.msra.mxu0 %v1441
        %1482 = vmatprep.subr.bf16.mxu0 0
        %1483 = vmatpush2.bf16.msra.mxu0 %v1440
        %1484 = vmatprep.subr.bf16.mxu0 0
        %1485 = vmatpush2.bf16.msra.mxu0 %v1439
        %1486 = vmatprep.subr.bf16.mxu0 0
        %1487 = vmatpush2.bf16.msra.mxu0 %v1438
        %1488 = vmatprep.subr.bf16.mxu0 0
        %1489 = vmatpush2.bf16.msra.mxu0 %v1437
        %1490 = vmatprep.subr.bf16.mxu0 0
        %1491 = vmatpush2.bf16.msra.mxu0 %v1436
        %1492 = vmatprep.mubr.bf16.mxu0 %v1361
        %1493 = vmatmul.mubr.bf16.gmra.mxu0 %v1359
        %v1494 = vpop.f32.mrf.mxu0
        %v1495 = vadd.f32 %v1355, %v1494
        %v1496 = vpop.f32.mrf.mxu0
        %v1497 = vpop.f32.mrf.mxu0
        %v1498 = vadd.f32 %v1355, %v1497
        %v1499 = vpop.f32.mrf.mxu0
        %1500 = vdwg.mxu0
        %v1501 = vmax.f32 %v1495, 0.0
        %v1502 = vmax.f32 %v1498, 0.0
        %v1503 = vunpack.c.l.bf16 %v1088
        %v1504 = vunpack.c.h.bf16 %v1088
        %v1505 = vadd.f32 %v1501, %v1503
        %v1506 = vadd.f32 %v1502, %v1504
        %v1507 = vmax.f32 %v1505, 0.0
        %v1508 = vmax.f32 %v1506, 0.0
        %1509 = vst [vmem:[%s495] sm:$0xff] %v1507
        %1510 = vst [vmem:[%s495 + $0x8] sm:$0xff] %v1508
        %s1511 = sand.u32 %s291, 1
        %s1512 = scalar_lea.sflag [#allocation5], %s1511
        %s1513 = sand.u32 %s291, 1
        %s1514 = smul.addr %s1513, 16
        %s1515 = scalar_lea.vmem [#allocation14], %s1514
        // Predicated region
        $region89: #{tpu_custom_call.1} parent=63 // pred_check
          %p1516 = pneg %p301
        $region90: #{tpu_custom_call.1} parent=63 // pred_check_branch
          %1518 = sbr.rel (%p1516) target = $region92
        $region91: #{tpu_custom_call.1} parent=63 // pred_region
          %s1519 = smul.u32 2, %s36
          %s1521 = ssub.s32 256, 256
          %1522 = vsyncadd %s1512, %s1521
          %s1523 = smul.addr %s35, 2
          %s1524 = sadd.s32 %s1519, %s1523
          %s1525 = smul.addr %s1524, 128
          %s1526 = scalar_lea.hbm %s11, %s1525
          %s1527 = sshll.u32 %s1515, 4
          %s1528 = int_to_ptr.vmem [resolvable:$true] %s1527
          %1533 = dma.vmem_to_hbm [thread:$0]  %s1528, 256, %s1526, %s1512, 128, 128, 8
        $region92: #{tpu_custom_call.1} parent=63 // pred_fallthru
          _
      $region64: #{tpu_custom_call.1} parent=5 // pred_fallthru
        _
      %p1534 = scmp.le.s32.totalorder 2, %s26
      // Predicated region
      $region93: #{tpu_custom_call.1} parent=5 // pred_check
        %p1535 = pneg %p1534
      $region94: #{tpu_custom_call.1} parent=5 // pred_check_branch
        %1537 = sbr.rel (%p1535) target = $region96
      $region95: #{tpu_custom_call.1} parent=5 // pred_region
        %s1538 = ssub.s32 %s26, 2
        // Predicated region
        $region97: #{tpu_custom_call.1} parent=95 // pred_check
          %p1539 = pneg %p307
        $region98: #{tpu_custom_call.1} parent=95 // pred_check_branch
          %1541 = sbr.rel (%p1539) target = $region100
        $region99: #{tpu_custom_call.1} parent=95 // pred_region
          %s1542 = sand.u32 %s292, 1
          %s1543 = scalar_lea.sflag [#allocation5], %s1542
          %s1544 = sand.u32 %s292, 1
          %s1545 = smul.addr %s1544, 16
          %s1546 = scalar_lea.vmem [#allocation14], %s1545
          %1547 = dma.done %s1543, 256
        $region100: #{tpu_custom_call.1} parent=95 // pred_fallthru
          _
      $region96: #{tpu_custom_call.1} parent=5 // pred_fallthru
        _
    $region6: #{tpu_custom_call.1} parent=1 // loop_footer
      %s30 = sadd.s32 1, %s26
    $region7: #{tpu_custom_call.1} parent=1 // loop_footer_branch
      %25 = sbr.rel target = $region3
    $region8: #{tpu_custom_call.1} parent=1 // loop_exit
      _
    %1548 = vsyncpa [#allocation4], 1
    %s1549 = scalar_lea.sflag [#allocation4], 1
    %1550 = vsyncpa %s1549, 1
    %1551 = vsyncpa [#allocation7], 1
    %1552 = vsyncpa [#allocation10], 1
    %1553 = vsyncpa [#allocation13], 1
    %1554 = vsyncpa [#allocation5], 1
    %s1555 = scalar_lea.sflag [#allocation5], 1
    %1556 = vsyncpa %s1555, 1

</llo_original>
